<compile_context>
chip_gen: v5e
topology: v5e:2x2
jax: 0.10.0
libtpu: 0.0.40
codegen_flags: <defaults>
</compile_context>

<pallas_src>
import functools

import jax
import jax.numpy as jnp
from jax.experimental import pallas as pl
from jax.experimental.pallas import tpu as pltpu


def wavenet_kernel(x_ref,                      # (1, Cin, N)   bf16, x[t]
                   wc0_ref, wc1_ref, bc_ref,   # (R, Cin) bf16 x2, (R, 1) f32
                   wd0_ref, wd1_ref, bd_ref,   # (NL, 2R, R) bf16 x2, (NL, 2R, 1) f32
                   ws_ref, bst_ref,            # (NL, S, R) bf16, (S, 1) f32
                   wf1_ref, bf1_ref,           # (S, S) bf16, (S, 1) f32
                   wf2t_ref, bf2_ref,          # (S, O) bf16, (O, 1) f32
                   out_ref,                    # (1, O, N)  f32
                   *, num_layers, seg_len, valid_len):
    f32 = jnp.float32
    x = x_ref[0].astype(f32)                   # (Cin, N)
    R = wc0_ref.shape[0]
    N = x.shape[-1]

    # Lane index *within each packed batch segment* (shape (1, N) to keep
    # vreg pressure minimal); guarantees rolls never leak data across the
    # packed batch boundaries.
    t_local = jax.lax.broadcasted_iota(jnp.int32, (1, N), 1) % seg_len

    def shifted(a, d):
        # a[:, t-d] with zero fill for t_local < d (XLU roll + VPU select).
        return jnp.where(t_local >= d, pltpu.roll(a, d, 1), 0.0)

    # Fused causal conv (k=2): h[:, t] = Wc0 x[:, t-1] + Wc1 x[:, t] + bc.
    h = (jnp.dot(wc0_ref[...].astype(f32), shifted(x, 1),
                 preferred_element_type=f32)
         + jnp.dot(wc1_ref[...].astype(f32), x, preferred_element_type=f32)
         + bc_ref[...])                                            # (R, N)

    S = ws_ref.shape[1]
    skip_sum = jnp.zeros((S, N), f32)

    # TODO(synk): switch to lax.fori_loop (+ SMEM dilation table, dynamic
    # wd/ws indexing) once num_layers exceeds ~6-8; the full unroll is fine
    # at this depth and keeps live ranges small.
    for i in range(num_layers):
        d = 2 ** i
        hs = shifted(h, d)                                         # (R, N)
        # Dilated conv as two tap dots (no concat copy, no (2R,N) hg temp).
        fg = (jnp.dot(wd0_ref[i].astype(f32), hs, preferred_element_type=f32)
              + jnp.dot(wd1_ref[i].astype(f32), h, preferred_element_type=f32)
              + bd_ref[i])                                         # (2R, N)
        gated = jax.nn.sigmoid(fg[R:]) * jnp.tanh(fg[:R])          # (R, N)
        skip_sum = skip_sum + jnp.dot(ws_ref[i].astype(f32), gated,
                                      preferred_element_type=f32)
        h = h + gated

    # Skip biases were hoisted: bst = sum_i bs[i], added once.
    z = jnp.maximum(skip_sum + bst_ref[...], 0.0)
    z = jnp.maximum(jnp.dot(wf1_ref[...].astype(f32), z,
                            preferred_element_type=f32) + bf1_ref[...], 0.0)

    wf2t = wf2t_ref[...].astype(f32)                               # (S, O)
    if wf2t.shape[1] == 1:
        # O == 1: VPU weighted row-sum + XLU sublane reduce beats a 1-row
        # MXU matmul / result-pop with a sublane-masked store path.
        out = jnp.sum(z * wf2t, axis=0, keepdims=True) + bf2_ref[...]
    else:
        out = jnp.einsum('so,sn->on', wf2t, z,
                         preferred_element_type=f32) + bf2_ref[...]

    # Zero the lane-padding region so the padded output holds no garbage.
    out_ref[0] = jnp.where(t_local < valid_len, out, 0.0)


def wavenet_forward(x, params, *, num_layers, batch_tile=None):
    """x: (B, input_dim, L) -> (B, output_dim, L + 1)."""
    B, Cin, L = x.shape
    L1 = L + 1
    Lp = ((L1 + 127) // 128) * 128            # lane-pad time to a multiple of 128

    # Pack TB batch elements along the lane axis per grid step.
    if batch_tile is None:
        batch_tile = 2 if B % 2 == 0 else 1
    TB = batch_tile
    assert B % TB == 0, (B, TB)
    G = B // TB
    N = TB * Lp

    (wc0, wc1, bc, wd0, wd1, bd, ws, bst, wf1, bf1, wf2t, bf2) = params
    O = bf2.shape[0]

    # bf16 input storage halves HBM->VMEM DMA bytes; only x[t] is shipped —
    # the x[t-1] tap is rebuilt in-kernel with a masked pltpu.roll.
    xp = jnp.pad(x.astype(jnp.bfloat16), ((0, 0), (0, 0), (0, Lp - L)))
    # lane n = tb * Lp + t
    xp = xp.reshape(G, TB, Cin, Lp).transpose(0, 2, 1, 3).reshape(G, Cin, N)

    def const_spec(a):
        # Constant weight/bias blocks: the block index never changes across
        # the grid, so single-buffer them (no 2x VMEM for double buffering).
        return pl.BlockSpec(a.shape, lambda g, _nd=a.ndim: (0,) * _nd,
                            pipeline_mode=pl.Buffered(1))

    consts = (wc0, wc1, bc, wd0, wd1, bd, ws, bst, wf1, bf1, wf2t, bf2)

    out = pl.pallas_call(
        functools.partial(wavenet_kernel, num_layers=num_layers,
                          seg_len=Lp, valid_len=L1),
        out_shape=jax.ShapeDtypeStruct((G, O, N), jnp.float32),
        grid=(G,),
        in_specs=[pl.BlockSpec((1, Cin, N), lambda g: (g, 0, 0))]
                 + [const_spec(a) for a in consts],
        out_specs=pl.BlockSpec((1, O, N), lambda g: (g, 0, 0)),
        compiler_params=pltpu.CompilerParams(
            dimension_semantics=("parallel",),
            vmem_limit_bytes=32 * 1024 * 1024),   # explicit, v7x-safe headroom
    )(xp, *consts)

    # Unpack the lane-packed batches and drop the lane padding.
    out = out.reshape(G, O, TB, Lp).transpose(0, 2, 1, 3).reshape(B, O, Lp)
    return out[:, :, :L1]


def init_params(key, input_dim, residual_channels, skip_channels,
                dilation_layers, output_dim):
    """Deterministic init mirroring the nn.Conv1d shapes of WaveNetModel,
    repacked into channel-major per-tap matmul layouts (weights in bf16)."""
    R, S, O, NL = residual_channels, skip_channels, output_dim, dilation_layers
    keys = iter(jax.random.split(key, 8 + 4 * NL))
    bf16 = jnp.bfloat16

    def unif(shape, fan_in):
        bound = 1.0 / float(fan_in) ** 0.5
        return jax.random.uniform(next(keys), shape, jnp.float32, -bound, bound)

    # causal_conv: Conv1d(input_dim, R, k=2)            weight (R, Cin, 2)
    Wc = unif((R, input_dim, 2), input_dim * 2)
    bc = unif((R,), input_dim * 2)
    Wd_l, bd_l, Ws_l, bs_l = [], [], [], []
    for _ in range(NL):
        Wd_l.append(unif((2 * R, R, 2), R * 2))          # dilated conv (2R, R, 2)
        bd_l.append(unif((2 * R,), R * 2))
        Ws_l.append(unif((S, R, 1), R))                  # skip 1x1     (S, R, 1)
        bs_l.append(unif((S,), R))
    Wd, bd = jnp.stack(Wd_l), jnp.stack(bd_l)
    Ws, bs_ = jnp.stack(Ws_l), jnp.stack(bs_l)
    Wf1, bf1 = unif((S, S, 1), S), unif((S,), S)         # final_conv1
    Wf2, bf2 = unif((O, S, 1), S), unif((O,), S)         # final_conv2

    return (
        Wc[:, :, 0].astype(bf16),             # wc0: multiplies x[t-1]
        Wc[:, :, 1].astype(bf16),             # wc1: multiplies x[t]
        bc[:, None],                          # biases stay f32 (tiny)
        Wd[:, :, :, 0].astype(bf16),          # wd0 (NL, 2R, R): shifted tap
        Wd[:, :, :, 1].astype(bf16),          # wd1 (NL, 2R, R): current tap
        bd[:, :, None],
        Ws[:, :, :, 0].astype(bf16),          # (NL, S, R)
        jnp.sum(bs_, axis=0)[:, None],        # bst: hoisted sum of skip biases
        Wf1[:, :, 0].astype(bf16),            # (S, S)
        bf1[:, None],
        Wf2[:, :, 0].T.astype(bf16),          # wf2t (S, O) for the row-sum path
        bf2[:, None],
    )


def wavenet_reference(x, params, *, num_layers):
    """Pure-JAX reference of the same (causal-trim, bf16-weight) math."""
    B, Cin, L = x.shape
    L1 = L + 1
    (wc0, wc1, bc, wd0, wd1, bd, ws, bst, wf1, bf1, wf2t, bf2) = params
    f32 = jnp.float32
    up = lambda a: a.astype(f32)
    R = bc.shape[0]

    xq = x.astype(jnp.bfloat16).astype(f32)          # mirror bf16 HBM storage
    xp = jnp.pad(xq, ((0, 0), (0, 0), (0, 1)))       # (B, Cin, L1), x[L] = 0

    def shift(a, d):
        return jnp.pad(a, ((0, 0), (0, 0), (d, 0)))[:, :, :L1]

    mm = lambda w, a: jnp.einsum('oc,bcl->bol', up(w), a)
    h = mm(wc0, shift(xp, 1)) + mm(wc1, xp) + up(bc)[None]
    skip = jnp.zeros((B, ws.shape[1], L1), f32)
    for i in range(num_layers):
        d = 2 ** i
        hs = shift(h, d)
        fg = mm(wd0[i], hs) + mm(wd1[i], h) + up(bd[i])[None]
        gated = jax.nn.sigmoid(fg[:, R:]) * jnp.tanh(fg[:, :R])
        skip = skip + mm(ws[i], gated)
        h = h + gated
    z = jax.nn.relu(skip + up(bst)[None])
    z = jax.nn.relu(mm(wf1, z) + up(bf1)[None])
    return jnp.einsum('so,bsl->bol', up(wf2t), z) + up(bf2)[None]


if __name__ == "__main__":
    B, Cin, L = 4, 4, 63          # batch, input_dim, seq_len
    R, S, NL, O = 16, 16, 4, 1    # residual_ch, skip_ch, dilation_layers, output_dim

    key = jax.random.PRNGKey(0)
    kx, kp = jax.random.split(key)
    x = jax.random.normal(kx, (B, Cin, L), jnp.float32)
    params = init_params(kp, Cin, R, S, NL, O)

    out = wavenet_forward(x, params, num_layers=NL)
    out = jax.block_until_ready(out)
    assert out.shape == (B, O, L + 1), out.shape

    ref = wavenet_reference(x, params, num_layers=NL)
    if not jnp.allclose(out, ref, atol=1e-3, rtol=1e-3):
        err = float(jnp.max(jnp.abs(out - ref)))
        raise AssertionError(f"Pallas kernel mismatch vs JAX reference (max err {err})")

    print("KERNEL_OK")
</pallas_src>

<mosaic_0001>
module attributes {stable_mosaic.version = 11 : i64} {
  func.func @wavenet_kernel(%arg0: i32, %arg1: memref<1x4x256xbf16, #tpu.memory_space<vmem>>, %arg2: memref<16x4xbf16, #tpu.memory_space<vmem>>, %arg3: memref<16x4xbf16, #tpu.memory_space<vmem>>, %arg4: memref<16x1xf32, #tpu.memory_space<vmem>>, %arg5: memref<4x32x16xbf16, #tpu.memory_space<vmem>>, %arg6: memref<4x32x16xbf16, #tpu.memory_space<vmem>>, %arg7: memref<4x32x1xf32, #tpu.memory_space<vmem>>, %arg8: memref<4x16x16xbf16, #tpu.memory_space<vmem>>, %arg9: memref<16x1xf32, #tpu.memory_space<vmem>>, %arg10: memref<16x16xbf16, #tpu.memory_space<vmem>>, %arg11: memref<16x1xf32, #tpu.memory_space<vmem>>, %arg12: memref<16x1xbf16, #tpu.memory_space<vmem>>, %arg13: memref<1x1xf32, #tpu.memory_space<vmem>>, %arg14: memref<1x1x256xf32, #tpu.memory_space<vmem>>) attributes {dimension_semantics = [#tpu.dimension_semantics<parallel>], iteration_bounds = array<i64: 2>, scalar_prefetch = 0 : i64, scratch_operands = 0 : i64, tpu.core_type = #tpu.core_type<tc>, window_params = [{transform_indices = @transform_0, window_bounds = array<i64: 1, 4, 256>}, {pipeline_mode = #tpu.pipeline_mode<synchronous>, transform_indices = @transform_1, window_bounds = array<i64: 16, 4>}, {pipeline_mode = #tpu.pipeline_mode<synchronous>, transform_indices = @transform_2, window_bounds = array<i64: 16, 4>}, {pipeline_mode = #tpu.pipeline_mode<synchronous>, transform_indices = @transform_3, window_bounds = array<i64: 16, 1>}, {pipeline_mode = #tpu.pipeline_mode<synchronous>, transform_indices = @transform_4, window_bounds = array<i64: 4, 32, 16>}, {pipeline_mode = #tpu.pipeline_mode<synchronous>, transform_indices = @transform_5, window_bounds = array<i64: 4, 32, 16>}, {pipeline_mode = #tpu.pipeline_mode<synchronous>, transform_indices = @transform_6, window_bounds = array<i64: 4, 32, 1>}, {pipeline_mode = #tpu.pipeline_mode<synchronous>, transform_indices = @transform_7, window_bounds = array<i64: 4, 16, 16>}, {pipeline_mode = #tpu.pipeline_mode<synchronous>, transform_indices = @transform_8, window_bounds = array<i64: 16, 1>}, {pipeline_mode = #tpu.pipeline_mode<synchronous>, transform_indices = @transform_9, window_bounds = array<i64: 16, 16>}, {pipeline_mode = #tpu.pipeline_mode<synchronous>, transform_indices = @transform_10, window_bounds = array<i64: 16, 1>}, {pipeline_mode = #tpu.pipeline_mode<synchronous>, transform_indices = @transform_11, window_bounds = array<i64: 16, 1>}, {pipeline_mode = #tpu.pipeline_mode<synchronous>, transform_indices = @transform_12, window_bounds = array<i64: 1, 1>}, {transform_indices = @transform_13, window_bounds = array<i64: 1, 1, 256>}]} {
    %c0 = arith.constant 0 : index
    %c0_0 = arith.constant 0 : index
    %c0_1 = arith.constant 0 : index
    %0 = vector.load %arg1[%c0, %c0_0, %c0_1] : memref<1x4x256xbf16, #tpu.memory_space<vmem>>, vector<1x4x256xbf16>
    %1 = vector.shape_cast %0 : vector<1x4x256xbf16> to vector<4x256xbf16>
    %2 = arith.extf %1 : vector<4x256xbf16> to vector<4x256xf32>
    %3 = tpu.iota {dimensions = array<i32: 1>} : vector<1x256xi32>
    %c128_i32 = arith.constant 128 : i32
    %c0_i32 = arith.constant 0 : i32
    %4 = arith.cmpi eq, %c128_i32, %c0_i32 : i32
    %c1_i32 = arith.constant 1 : i32
    %5 = arith.select %4, %c1_i32, %c128_i32 : i32
    %6 = vector.broadcast %5 : i32 to vector<1x256xi32>
    %7 = arith.remsi %3, %6 : vector<1x256xi32>
    %c0_i32_2 = arith.constant 0 : i32
    %8 = vector.broadcast %c0_i32_2 : i32 to vector<1x256xi32>
    %9 = arith.cmpi ne, %7, %8 : vector<1x256xi32>
    %c0_i32_3 = arith.constant 0 : i32
    %10 = vector.broadcast %c0_i32_3 : i32 to vector<1x256xi32>
    %11 = arith.cmpi slt, %7, %10 : vector<1x256xi32>
    %c0_i32_4 = arith.constant 0 : i32
    %12 = arith.cmpi slt, %5, %c0_i32_4 : i32
    %13 = vector.broadcast %12 : i1 to vector<1x256xi1>
    %14 = vector.broadcast %13 : vector<1x256xi1> to vector<1x256xi1>
    %15 = arith.xori %11, %14 : vector<1x256xi1>
    %16 = arith.andi %15, %9 : vector<1x256xi1>
    %17 = vector.broadcast %5 : i32 to vector<1x256xi32>
    %18 = arith.addi %7, %17 : vector<1x256xi32>
    %19 = arith.select %16, %18, %7 : vector<1x256xi1>, vector<1x256xi32>
    %c0_5 = arith.constant 0 : index
    %c0_6 = arith.constant 0 : index
    %20 = vector.load %arg2[%c0_5, %c0_6] : memref<16x4xbf16, #tpu.memory_space<vmem>>, vector<16x4xbf16>
    %21 = arith.extf %20 : vector<16x4xbf16> to vector<16x4xf32>
    %c1_i32_7 = arith.constant 1 : i32
    %22 = vector.broadcast %c1_i32_7 : i32 to vector<1x256xi32>
    %23 = arith.cmpi sge, %19, %22 : vector<1x256xi32>
    %c1_i32_8 = arith.constant 1 : i32
    %24 = tpu.dynamic_rotate %2 by %c1_i32_8 dim 1 : vector<4x256xf32>, i32 -> vector<4x256xf32>
    %cst = arith.constant 0.000000e+00 : f32
    %25 = vector.shape_cast %23 : vector<1x256xi1> to vector<1x256xi1>
    %26 = vector.broadcast %25 : vector<1x256xi1> to vector<4x256xi1>
    %27 = vector.broadcast %cst : f32 to vector<4x256xf32>
    %28 = arith.select %26, %24, %27 : vector<4x256xi1>, vector<4x256xf32>
    %cst_9 = arith.constant dense<0.000000e+00> : vector<16x256xf32>
    %29 = tpu.matmul %21, %28, %cst_9 {dimension_numbers = #tpu.dot_dimension_numbers<[1], [0], [0], [1], [0, 0, 1, 1], [], []>} : vector<16x4xf32>, vector<4x256xf32>, vector<16x256xf32> -> vector<16x256xf32>
    %c0_10 = arith.constant 0 : index
    %c0_11 = arith.constant 0 : index
    %30 = vector.load %arg3[%c0_10, %c0_11] : memref<16x4xbf16, #tpu.memory_space<vmem>>, vector<16x4xbf16>
    %31 = arith.extf %30 : vector<16x4xbf16> to vector<16x4xf32>
    %cst_12 = arith.constant dense<0.000000e+00> : vector<16x256xf32>
    %32 = tpu.matmul %31, %2, %cst_12 {dimension_numbers = #tpu.dot_dimension_numbers<[1], [0], [0], [1], [0, 0, 1, 1], [], []>} : vector<16x4xf32>, vector<4x256xf32>, vector<16x256xf32> -> vector<16x256xf32>
    %33 = arith.addf %29, %32 : vector<16x256xf32>
    %c0_13 = arith.constant 0 : index
    %c0_14 = arith.constant 0 : index
    %34 = vector.load %arg4[%c0_13, %c0_14] : memref<16x1xf32, #tpu.memory_space<vmem>>, vector<16x1xf32>
    %35 = vector.broadcast %34 : vector<16x1xf32> to vector<16x256xf32>
    %36 = arith.addf %33, %35 : vector<16x256xf32>
    %cst_15 = arith.constant 0.000000e+00 : f32
    %37 = vector.broadcast %cst_15 : f32 to vector<16x256xf32>
    %c1_i32_16 = arith.constant 1 : i32
    %38 = vector.broadcast %c1_i32_16 : i32 to vector<1x256xi32>
    %39 = arith.cmpi sge, %19, %38 : vector<1x256xi32>
    %c1_i32_17 = arith.constant 1 : i32
    %40 = tpu.dynamic_rotate %36 by %c1_i32_17 dim 1 : vector<16x256xf32>, i32 -> vector<16x256xf32>
    %cst_18 = arith.constant 0.000000e+00 : f32
    %41 = vector.shape_cast %39 : vector<1x256xi1> to vector<1x256xi1>
    %42 = vector.broadcast %41 : vector<1x256xi1> to vector<16x256xi1>
    %43 = vector.broadcast %cst_18 : f32 to vector<16x256xf32>
    %44 = arith.select %42, %40, %43 : vector<16x256xi1>, vector<16x256xf32>
    %c0_19 = arith.constant 0 : index
    %c0_20 = arith.constant 0 : index
    %c0_21 = arith.constant 0 : index
    %45 = vector.load %arg5[%c0_19, %c0_20, %c0_21] : memref<4x32x16xbf16, #tpu.memory_space<vmem>>, vector<1x32x16xbf16>
    %46 = vector.shape_cast %45 : vector<1x32x16xbf16> to vector<32x16xbf16>
    %47 = arith.extf %46 : vector<32x16xbf16> to vector<32x16xf32>
    %cst_22 = arith.constant dense<0.000000e+00> : vector<32x256xf32>
    %48 = tpu.matmul %47, %44, %cst_22 {dimension_numbers = #tpu.dot_dimension_numbers<[1], [0], [0], [1], [0, 0, 1, 1], [], []>} : vector<32x16xf32>, vector<16x256xf32>, vector<32x256xf32> -> vector<32x256xf32>
    %c0_23 = arith.constant 0 : index
    %c0_24 = arith.constant 0 : index
    %c0_25 = arith.constant 0 : index
    %49 = vector.load %arg6[%c0_23, %c0_24, %c0_25] : memref<4x32x16xbf16, #tpu.memory_space<vmem>>, vector<1x32x16xbf16>
    %50 = vector.shape_cast %49 : vector<1x32x16xbf16> to vector<32x16xbf16>
    %51 = arith.extf %50 : vector<32x16xbf16> to vector<32x16xf32>
    %cst_26 = arith.constant dense<0.000000e+00> : vector<32x256xf32>
    %52 = tpu.matmul %51, %36, %cst_26 {dimension_numbers = #tpu.dot_dimension_numbers<[1], [0], [0], [1], [0, 0, 1, 1], [], []>} : vector<32x16xf32>, vector<16x256xf32>, vector<32x256xf32> -> vector<32x256xf32>
    %53 = arith.addf %48, %52 : vector<32x256xf32>
    %c0_27 = arith.constant 0 : index
    %c0_28 = arith.constant 0 : index
    %c0_29 = arith.constant 0 : index
    %54 = vector.load %arg7[%c0_27, %c0_28, %c0_29] : memref<4x32x1xf32, #tpu.memory_space<vmem>>, vector<1x32x1xf32>
    %55 = vector.shape_cast %54 : vector<1x32x1xf32> to vector<32x1xf32>
    %56 = vector.broadcast %55 : vector<32x1xf32> to vector<32x256xf32>
    %57 = arith.addf %53, %56 : vector<32x256xf32>
    %58 = vector.extract_strided_slice %57 {offsets = [16, 0], sizes = [16, 256], strides = [1, 1]} : vector<32x256xf32> to vector<16x256xf32>
    %59 = arith.negf %58 : vector<16x256xf32>
    %60 = math.exp %59 : vector<16x256xf32>
    %cst_30 = arith.constant 1.000000e+00 : f32
    %61 = vector.broadcast %cst_30 : f32 to vector<16x256xf32>
    %62 = arith.addf %61, %60 : vector<16x256xf32>
    %63 = arith.divf %61, %62 : vector<16x256xf32>
    %64 = vector.extract_strided_slice %57 {offsets = [0, 0], sizes = [16, 256], strides = [1, 1]} : vector<32x256xf32> to vector<16x256xf32>
    %65 = math.tanh %64 : vector<16x256xf32>
    %66 = arith.mulf %63, %65 : vector<16x256xf32>
    %c0_31 = arith.constant 0 : index
    %c0_32 = arith.constant 0 : index
    %c0_33 = arith.constant 0 : index
    %67 = vector.load %arg8[%c0_31, %c0_32, %c0_33] : memref<4x16x16xbf16, #tpu.memory_space<vmem>>, vector<1x16x16xbf16>
    %68 = vector.shape_cast %67 : vector<1x16x16xbf16> to vector<16x16xbf16>
    %69 = arith.extf %68 : vector<16x16xbf16> to vector<16x16xf32>
    %cst_34 = arith.constant dense<0.000000e+00> : vector<16x256xf32>
    %70 = tpu.matmul %69, %66, %cst_34 {dimension_numbers = #tpu.dot_dimension_numbers<[1], [0], [0], [1], [0, 0, 1, 1], [], []>} : vector<16x16xf32>, vector<16x256xf32>, vector<16x256xf32> -> vector<16x256xf32>
    %71 = arith.addf %37, %70 : vector<16x256xf32>
    %72 = arith.addf %36, %66 : vector<16x256xf32>
    %c2_i32 = arith.constant 2 : i32
    %73 = vector.broadcast %c2_i32 : i32 to vector<1x256xi32>
    %74 = arith.cmpi sge, %19, %73 : vector<1x256xi32>
    %c2_i32_35 = arith.constant 2 : i32
    %75 = tpu.dynamic_rotate %72 by %c2_i32_35 dim 1 : vector<16x256xf32>, i32 -> vector<16x256xf32>
    %cst_36 = arith.constant 0.000000e+00 : f32
    %76 = vector.shape_cast %74 : vector<1x256xi1> to vector<1x256xi1>
    %77 = vector.broadcast %76 : vector<1x256xi1> to vector<16x256xi1>
    %78 = vector.broadcast %cst_36 : f32 to vector<16x256xf32>
    %79 = arith.select %77, %75, %78 : vector<16x256xi1>, vector<16x256xf32>
    %c1 = arith.constant 1 : index
    %c0_37 = arith.constant 0 : index
    %c0_38 = arith.constant 0 : index
    %80 = vector.load %arg5[%c1, %c0_37, %c0_38] : memref<4x32x16xbf16, #tpu.memory_space<vmem>>, vector<1x32x16xbf16>
    %81 = vector.shape_cast %80 : vector<1x32x16xbf16> to vector<32x16xbf16>
    %82 = arith.extf %81 : vector<32x16xbf16> to vector<32x16xf32>
    %cst_39 = arith.constant dense<0.000000e+00> : vector<32x256xf32>
    %83 = tpu.matmul %82, %79, %cst_39 {dimension_numbers = #tpu.dot_dimension_numbers<[1], [0], [0], [1], [0, 0, 1, 1], [], []>} : vector<32x16xf32>, vector<16x256xf32>, vector<32x256xf32> -> vector<32x256xf32>
    %c1_40 = arith.constant 1 : index
    %c0_41 = arith.constant 0 : index
    %c0_42 = arith.constant 0 : index
    %84 = vector.load %arg6[%c1_40, %c0_41, %c0_42] : memref<4x32x16xbf16, #tpu.memory_space<vmem>>, vector<1x32x16xbf16>
    %85 = vector.shape_cast %84 : vector<1x32x16xbf16> to vector<32x16xbf16>
    %86 = arith.extf %85 : vector<32x16xbf16> to vector<32x16xf32>
    %cst_43 = arith.constant dense<0.000000e+00> : vector<32x256xf32>
    %87 = tpu.matmul %86, %72, %cst_43 {dimension_numbers = #tpu.dot_dimension_numbers<[1], [0], [0], [1], [0, 0, 1, 1], [], []>} : vector<32x16xf32>, vector<16x256xf32>, vector<32x256xf32> -> vector<32x256xf32>
    %88 = arith.addf %83, %87 : vector<32x256xf32>
    %c1_44 = arith.constant 1 : index
    %c0_45 = arith.constant 0 : index
    %c0_46 = arith.constant 0 : index
    %89 = vector.load %arg7[%c1_44, %c0_45, %c0_46] : memref<4x32x1xf32, #tpu.memory_space<vmem>>, vector<1x32x1xf32>
    %90 = vector.shape_cast %89 : vector<1x32x1xf32> to vector<32x1xf32>
    %91 = vector.broadcast %90 : vector<32x1xf32> to vector<32x256xf32>
    %92 = arith.addf %88, %91 : vector<32x256xf32>
    %93 = vector.extract_strided_slice %92 {offsets = [16, 0], sizes = [16, 256], strides = [1, 1]} : vector<32x256xf32> to vector<16x256xf32>
    %94 = arith.negf %93 : vector<16x256xf32>
    %95 = math.exp %94 : vector<16x256xf32>
    %cst_47 = arith.constant 1.000000e+00 : f32
    %96 = vector.broadcast %cst_47 : f32 to vector<16x256xf32>
    %97 = arith.addf %96, %95 : vector<16x256xf32>
    %98 = arith.divf %96, %97 : vector<16x256xf32>
    %99 = vector.extract_strided_slice %92 {offsets = [0, 0], sizes = [16, 256], strides = [1, 1]} : vector<32x256xf32> to vector<16x256xf32>
    %100 = math.tanh %99 : vector<16x256xf32>
    %101 = arith.mulf %98, %100 : vector<16x256xf32>
    %c1_48 = arith.constant 1 : index
    %c0_49 = arith.constant 0 : index
    %c0_50 = arith.constant 0 : index
    %102 = vector.load %arg8[%c1_48, %c0_49, %c0_50] : memref<4x16x16xbf16, #tpu.memory_space<vmem>>, vector<1x16x16xbf16>
    %103 = vector.shape_cast %102 : vector<1x16x16xbf16> to vector<16x16xbf16>
    %104 = arith.extf %103 : vector<16x16xbf16> to vector<16x16xf32>
    %cst_51 = arith.constant dense<0.000000e+00> : vector<16x256xf32>
    %105 = tpu.matmul %104, %101, %cst_51 {dimension_numbers = #tpu.dot_dimension_numbers<[1], [0], [0], [1], [0, 0, 1, 1], [], []>} : vector<16x16xf32>, vector<16x256xf32>, vector<16x256xf32> -> vector<16x256xf32>
    %106 = arith.addf %71, %105 : vector<16x256xf32>
    %107 = arith.addf %72, %101 : vector<16x256xf32>
    %c4_i32 = arith.constant 4 : i32
    %108 = vector.broadcast %c4_i32 : i32 to vector<1x256xi32>
    %109 = arith.cmpi sge, %19, %108 : vector<1x256xi32>
    %c4_i32_52 = arith.constant 4 : i32
    %110 = tpu.dynamic_rotate %107 by %c4_i32_52 dim 1 : vector<16x256xf32>, i32 -> vector<16x256xf32>
    %cst_53 = arith.constant 0.000000e+00 : f32
    %111 = vector.shape_cast %109 : vector<1x256xi1> to vector<1x256xi1>
    %112 = vector.broadcast %111 : vector<1x256xi1> to vector<16x256xi1>
    %113 = vector.broadcast %cst_53 : f32 to vector<16x256xf32>
    %114 = arith.select %112, %110, %113 : vector<16x256xi1>, vector<16x256xf32>
    %c2 = arith.constant 2 : index
    %c0_54 = arith.constant 0 : index
    %c0_55 = arith.constant 0 : index
    %115 = vector.load %arg5[%c2, %c0_54, %c0_55] : memref<4x32x16xbf16, #tpu.memory_space<vmem>>, vector<1x32x16xbf16>
    %116 = vector.shape_cast %115 : vector<1x32x16xbf16> to vector<32x16xbf16>
    %117 = arith.extf %116 : vector<32x16xbf16> to vector<32x16xf32>
    %cst_56 = arith.constant dense<0.000000e+00> : vector<32x256xf32>
    %118 = tpu.matmul %117, %114, %cst_56 {dimension_numbers = #tpu.dot_dimension_numbers<[1], [0], [0], [1], [0, 0, 1, 1], [], []>} : vector<32x16xf32>, vector<16x256xf32>, vector<32x256xf32> -> vector<32x256xf32>
    %c2_57 = arith.constant 2 : index
    %c0_58 = arith.constant 0 : index
    %c0_59 = arith.constant 0 : index
    %119 = vector.load %arg6[%c2_57, %c0_58, %c0_59] : memref<4x32x16xbf16, #tpu.memory_space<vmem>>, vector<1x32x16xbf16>
    %120 = vector.shape_cast %119 : vector<1x32x16xbf16> to vector<32x16xbf16>
    %121 = arith.extf %120 : vector<32x16xbf16> to vector<32x16xf32>
    %cst_60 = arith.constant dense<0.000000e+00> : vector<32x256xf32>
    %122 = tpu.matmul %121, %107, %cst_60 {dimension_numbers = #tpu.dot_dimension_numbers<[1], [0], [0], [1], [0, 0, 1, 1], [], []>} : vector<32x16xf32>, vector<16x256xf32>, vector<32x256xf32> -> vector<32x256xf32>
    %123 = arith.addf %118, %122 : vector<32x256xf32>
    %c2_61 = arith.constant 2 : index
    %c0_62 = arith.constant 0 : index
    %c0_63 = arith.constant 0 : index
    %124 = vector.load %arg7[%c2_61, %c0_62, %c0_63] : memref<4x32x1xf32, #tpu.memory_space<vmem>>, vector<1x32x1xf32>
    %125 = vector.shape_cast %124 : vector<1x32x1xf32> to vector<32x1xf32>
    %126 = vector.broadcast %125 : vector<32x1xf32> to vector<32x256xf32>
    %127 = arith.addf %123, %126 : vector<32x256xf32>
    %128 = vector.extract_strided_slice %127 {offsets = [16, 0], sizes = [16, 256], strides = [1, 1]} : vector<32x256xf32> to vector<16x256xf32>
    %129 = arith.negf %128 : vector<16x256xf32>
    %130 = math.exp %129 : vector<16x256xf32>
    %cst_64 = arith.constant 1.000000e+00 : f32
    %131 = vector.broadcast %cst_64 : f32 to vector<16x256xf32>
    %132 = arith.addf %131, %130 : vector<16x256xf32>
    %133 = arith.divf %131, %132 : vector<16x256xf32>
    %134 = vector.extract_strided_slice %127 {offsets = [0, 0], sizes = [16, 256], strides = [1, 1]} : vector<32x256xf32> to vector<16x256xf32>
    %135 = math.tanh %134 : vector<16x256xf32>
    %136 = arith.mulf %133, %135 : vector<16x256xf32>
    %c2_65 = arith.constant 2 : index
    %c0_66 = arith.constant 0 : index
    %c0_67 = arith.constant 0 : index
    %137 = vector.load %arg8[%c2_65, %c0_66, %c0_67] : memref<4x16x16xbf16, #tpu.memory_space<vmem>>, vector<1x16x16xbf16>
    %138 = vector.shape_cast %137 : vector<1x16x16xbf16> to vector<16x16xbf16>
    %139 = arith.extf %138 : vector<16x16xbf16> to vector<16x16xf32>
    %cst_68 = arith.constant dense<0.000000e+00> : vector<16x256xf32>
    %140 = tpu.matmul %139, %136, %cst_68 {dimension_numbers = #tpu.dot_dimension_numbers<[1], [0], [0], [1], [0, 0, 1, 1], [], []>} : vector<16x16xf32>, vector<16x256xf32>, vector<16x256xf32> -> vector<16x256xf32>
    %141 = arith.addf %106, %140 : vector<16x256xf32>
    %142 = arith.addf %107, %136 : vector<16x256xf32>
    %c8_i32 = arith.constant 8 : i32
    %143 = vector.broadcast %c8_i32 : i32 to vector<1x256xi32>
    %144 = arith.cmpi sge, %19, %143 : vector<1x256xi32>
    %c8_i32_69 = arith.constant 8 : i32
    %145 = tpu.dynamic_rotate %142 by %c8_i32_69 dim 1 : vector<16x256xf32>, i32 -> vector<16x256xf32>
    %cst_70 = arith.constant 0.000000e+00 : f32
    %146 = vector.shape_cast %144 : vector<1x256xi1> to vector<1x256xi1>
    %147 = vector.broadcast %146 : vector<1x256xi1> to vector<16x256xi1>
    %148 = vector.broadcast %cst_70 : f32 to vector<16x256xf32>
    %149 = arith.select %147, %145, %148 : vector<16x256xi1>, vector<16x256xf32>
    %c3 = arith.constant 3 : index
    %c0_71 = arith.constant 0 : index
    %c0_72 = arith.constant 0 : index
    %150 = vector.load %arg5[%c3, %c0_71, %c0_72] : memref<4x32x16xbf16, #tpu.memory_space<vmem>>, vector<1x32x16xbf16>
    %151 = vector.shape_cast %150 : vector<1x32x16xbf16> to vector<32x16xbf16>
    %152 = arith.extf %151 : vector<32x16xbf16> to vector<32x16xf32>
    %cst_73 = arith.constant dense<0.000000e+00> : vector<32x256xf32>
    %153 = tpu.matmul %152, %149, %cst_73 {dimension_numbers = #tpu.dot_dimension_numbers<[1], [0], [0], [1], [0, 0, 1, 1], [], []>} : vector<32x16xf32>, vector<16x256xf32>, vector<32x256xf32> -> vector<32x256xf32>
    %c3_74 = arith.constant 3 : index
    %c0_75 = arith.constant 0 : index
    %c0_76 = arith.constant 0 : index
    %154 = vector.load %arg6[%c3_74, %c0_75, %c0_76] : memref<4x32x16xbf16, #tpu.memory_space<vmem>>, vector<1x32x16xbf16>
    %155 = vector.shape_cast %154 : vector<1x32x16xbf16> to vector<32x16xbf16>
    %156 = arith.extf %155 : vector<32x16xbf16> to vector<32x16xf32>
    %cst_77 = arith.constant dense<0.000000e+00> : vector<32x256xf32>
    %157 = tpu.matmul %156, %142, %cst_77 {dimension_numbers = #tpu.dot_dimension_numbers<[1], [0], [0], [1], [0, 0, 1, 1], [], []>} : vector<32x16xf32>, vector<16x256xf32>, vector<32x256xf32> -> vector<32x256xf32>
    %158 = arith.addf %153, %157 : vector<32x256xf32>
    %c3_78 = arith.constant 3 : index
    %c0_79 = arith.constant 0 : index
    %c0_80 = arith.constant 0 : index
    %159 = vector.load %arg7[%c3_78, %c0_79, %c0_80] : memref<4x32x1xf32, #tpu.memory_space<vmem>>, vector<1x32x1xf32>
    %160 = vector.shape_cast %159 : vector<1x32x1xf32> to vector<32x1xf32>
    %161 = vector.broadcast %160 : vector<32x1xf32> to vector<32x256xf32>
    %162 = arith.addf %158, %161 : vector<32x256xf32>
    %163 = vector.extract_strided_slice %162 {offsets = [16, 0], sizes = [16, 256], strides = [1, 1]} : vector<32x256xf32> to vector<16x256xf32>
    %164 = arith.negf %163 : vector<16x256xf32>
    %165 = math.exp %164 : vector<16x256xf32>
    %cst_81 = arith.constant 1.000000e+00 : f32
    %166 = vector.broadcast %cst_81 : f32 to vector<16x256xf32>
    %167 = arith.addf %166, %165 : vector<16x256xf32>
    %168 = arith.divf %166, %167 : vector<16x256xf32>
    %169 = vector.extract_strided_slice %162 {offsets = [0, 0], sizes = [16, 256], strides = [1, 1]} : vector<32x256xf32> to vector<16x256xf32>
    %170 = math.tanh %169 : vector<16x256xf32>
    %171 = arith.mulf %168, %170 : vector<16x256xf32>
    %c3_82 = arith.constant 3 : index
    %c0_83 = arith.constant 0 : index
    %c0_84 = arith.constant 0 : index
    %172 = vector.load %arg8[%c3_82, %c0_83, %c0_84] : memref<4x16x16xbf16, #tpu.memory_space<vmem>>, vector<1x16x16xbf16>
    %173 = vector.shape_cast %172 : vector<1x16x16xbf16> to vector<16x16xbf16>
    %174 = arith.extf %173 : vector<16x16xbf16> to vector<16x16xf32>
    %cst_85 = arith.constant dense<0.000000e+00> : vector<16x256xf32>
    %175 = tpu.matmul %174, %171, %cst_85 {dimension_numbers = #tpu.dot_dimension_numbers<[1], [0], [0], [1], [0, 0, 1, 1], [], []>} : vector<16x16xf32>, vector<16x256xf32>, vector<16x256xf32> -> vector<16x256xf32>
    %176 = arith.addf %141, %175 : vector<16x256xf32>
    %c0_86 = arith.constant 0 : index
    %c0_87 = arith.constant 0 : index
    %177 = vector.load %arg9[%c0_86, %c0_87] : memref<16x1xf32, #tpu.memory_space<vmem>>, vector<16x1xf32>
    %178 = vector.broadcast %177 : vector<16x1xf32> to vector<16x256xf32>
    %179 = arith.addf %176, %178 : vector<16x256xf32>
    %cst_88 = arith.constant 0.000000e+00 : f32
    %180 = vector.broadcast %cst_88 : f32 to vector<16x256xf32>
    %181 = arith.maximumf %179, %180 : vector<16x256xf32>
    %c0_89 = arith.constant 0 : index
    %c0_90 = arith.constant 0 : index
    %182 = vector.load %arg10[%c0_89, %c0_90] : memref<16x16xbf16, #tpu.memory_space<vmem>>, vector<16x16xbf16>
    %183 = arith.extf %182 : vector<16x16xbf16> to vector<16x16xf32>
    %cst_91 = arith.constant dense<0.000000e+00> : vector<16x256xf32>
    %184 = tpu.matmul %183, %181, %cst_91 {dimension_numbers = #tpu.dot_dimension_numbers<[1], [0], [0], [1], [0, 0, 1, 1], [], []>} : vector<16x16xf32>, vector<16x256xf32>, vector<16x256xf32> -> vector<16x256xf32>
    %c0_92 = arith.constant 0 : index
    %c0_93 = arith.constant 0 : index
    %185 = vector.load %arg11[%c0_92, %c0_93] : memref<16x1xf32, #tpu.memory_space<vmem>>, vector<16x1xf32>
    %186 = vector.broadcast %185 : vector<16x1xf32> to vector<16x256xf32>
    %187 = arith.addf %184, %186 : vector<16x256xf32>
    %cst_94 = arith.constant 0.000000e+00 : f32
    %188 = vector.broadcast %cst_94 : f32 to vector<16x256xf32>
    %189 = arith.maximumf %187, %188 : vector<16x256xf32>
    %c0_95 = arith.constant 0 : index
    %c0_96 = arith.constant 0 : index
    %190 = vector.load %arg12[%c0_95, %c0_96] : memref<16x1xbf16, #tpu.memory_space<vmem>>, vector<16x1xbf16>
    %191 = arith.extf %190 : vector<16x1xbf16> to vector<16x1xf32>
    %192 = vector.broadcast %191 : vector<16x1xf32> to vector<16x256xf32>
    %193 = arith.mulf %189, %192 : vector<16x256xf32>
    %cst_97 = arith.constant dense<0.000000e+00> : vector<256xf32>
    %194 = vector.multi_reduction <add>, %193, %cst_97 [0] : vector<16x256xf32> to vector<256xf32>
    %195 = vector.shape_cast %194 : vector<256xf32> to vector<1x256xf32>
    %c0_98 = arith.constant 0 : index
    %c0_99 = arith.constant 0 : index
    %196 = vector.load %arg13[%c0_98, %c0_99] : memref<1x1xf32, #tpu.memory_space<vmem>>, vector<1x1xf32>
    %197 = vector.broadcast %196 : vector<1x1xf32> to vector<1x256xf32>
    %198 = arith.addf %195, %197 : vector<1x256xf32>
    %c64_i32 = arith.constant 64 : i32
    %199 = vector.broadcast %c64_i32 : i32 to vector<1x256xi32>
    %200 = arith.cmpi slt, %19, %199 : vector<1x256xi32>
    %cst_100 = arith.constant 0.000000e+00 : f32
    %201 = vector.broadcast %cst_100 : f32 to vector<1x256xf32>
    %202 = arith.select %200, %198, %201 : vector<1x256xi1>, vector<1x256xf32>
    %c0_101 = arith.constant 0 : index
    %c0_102 = arith.constant 0 : index
    %c0_103 = arith.constant 0 : index
    %203 = vector.load %arg14[%c0_101, %c0_102, %c0_103] : memref<1x1x256xf32, #tpu.memory_space<vmem>>, vector<1x1x256xf32>
    %204 = vector.shape_cast %203 : vector<1x1x256xf32> to vector<1x256xf32>
    %205 = vector.shape_cast %202 : vector<1x256xf32> to vector<1x1x256xf32>
    tpu.vector_store %arg14[%c0_101, %c0_102, %c0_103], %205 {strides = array<i32>} : memref<1x1x256xf32, #tpu.memory_space<vmem>>, vector<1x1x256xf32>,
    return
  }
  func.func @transform_0(%arg0: i32) -> (i32, i32, i32) {
    %c0_i32 = arith.constant 0 : i32
    %c0_i32_0 = arith.constant 0 : i32
    %c0_i32_1 = arith.constant 0 : i32
    return %arg0, %c0_i32, %c0_i32_0 : i32, i32, i32
  }
  func.func @transform_1(%arg0: i32) -> (i32, i32) {
    %c0_i32 = arith.constant 0 : i32
    %c0_i32_0 = arith.constant 0 : i32
    %c0_i32_1 = arith.constant 0 : i32
    return %c0_i32, %c0_i32_0 : i32, i32
  }
  func.func @transform_2(%arg0: i32) -> (i32, i32) {
    %c0_i32 = arith.constant 0 : i32
    %c0_i32_0 = arith.constant 0 : i32
    %c0_i32_1 = arith.constant 0 : i32
    return %c0_i32, %c0_i32_0 : i32, i32
  }
  func.func @transform_3(%arg0: i32) -> (i32, i32) {
    %c0_i32 = arith.constant 0 : i32
    %c0_i32_0 = arith.constant 0 : i32
    %c0_i32_1 = arith.constant 0 : i32
    return %c0_i32, %c0_i32_0 : i32, i32
  }
  func.func @transform_4(%arg0: i32) -> (i32, i32, i32) {
    %c0_i32 = arith.constant 0 : i32
    %c0_i32_0 = arith.constant 0 : i32
    %c0_i32_1 = arith.constant 0 : i32
    %c0_i32_2 = arith.constant 0 : i32
    return %c0_i32, %c0_i32_0, %c0_i32_1 : i32, i32, i32
  }
  func.func @transform_5(%arg0: i32) -> (i32, i32, i32) {
    %c0_i32 = arith.constant 0 : i32
    %c0_i32_0 = arith.constant 0 : i32
    %c0_i32_1 = arith.constant 0 : i32
    %c0_i32_2 = arith.constant 0 : i32
    return %c0_i32, %c0_i32_0, %c0_i32_1 : i32, i32, i32
  }
  func.func @transform_6(%arg0: i32) -> (i32, i32, i32) {
    %c0_i32 = arith.constant 0 : i32
    %c0_i32_0 = arith.constant 0 : i32
    %c0_i32_1 = arith.constant 0 : i32
    %c0_i32_2 = arith.constant 0 : i32
    return %c0_i32, %c0_i32_0, %c0_i32_1 : i32, i32, i32
  }
  func.func @transform_7(%arg0: i32) -> (i32, i32, i32) {
    %c0_i32 = arith.constant 0 : i32
    %c0_i32_0 = arith.constant 0 : i32
    %c0_i32_1 = arith.constant 0 : i32
    %c0_i32_2 = arith.constant 0 : i32
    return %c0_i32, %c0_i32_0, %c0_i32_1 : i32, i32, i32
  }
  func.func @transform_8(%arg0: i32) -> (i32, i32) {
    %c0_i32 = arith.constant 0 : i32
    %c0_i32_0 = arith.constant 0 : i32
    %c0_i32_1 = arith.constant 0 : i32
    return %c0_i32, %c0_i32_0 : i32, i32
  }
  func.func @transform_9(%arg0: i32) -> (i32, i32) {
    %c0_i32 = arith.constant 0 : i32
    %c0_i32_0 = arith.constant 0 : i32
    %c0_i32_1 = arith.constant 0 : i32
    return %c0_i32, %c0_i32_0 : i32, i32
  }
  func.func @transform_10(%arg0: i32) -> (i32, i32) {
    %c0_i32 = arith.constant 0 : i32
    %c0_i32_0 = arith.constant 0 : i32
    %c0_i32_1 = arith.constant 0 : i32
    return %c0_i32, %c0_i32_0 : i32, i32
  }
  func.func @transform_11(%arg0: i32) -> (i32, i32) {
    %c0_i32 = arith.constant 0 : i32
    %c0_i32_0 = arith.constant 0 : i32
    %c0_i32_1 = arith.constant 0 : i32
    return %c0_i32, %c0_i32_0 : i32, i32
  }
  func.func @transform_12(%arg0: i32) -> (i32, i32) {
    %c0_i32 = arith.constant 0 : i32
    %c0_i32_0 = arith.constant 0 : i32
    %c0_i32_1 = arith.constant 0 : i32
    return %c0_i32, %c0_i32_0 : i32, i32
  }
  func.func @transform_13(%arg0: i32) -> (i32, i32, i32) {
    %c0_i32 = arith.constant 0 : i32
    %c0_i32_0 = arith.constant 0 : i32
    %c0_i32_1 = arith.constant 0 : i32
    return %arg0, %c0_i32, %c0_i32_0 : i32, i32, i32
  }
}

</mosaic_0001>

<llo_original>
// kernel: tpu_custom_call.1
$region0: #{tpu_custom_call.1}
  #allocation0 [shape = 'u32[]', space=smem, size = 0x4, offset = 0x4, fixed_abs, tag = 'smem constant byte address 0x4 - core index']
  #allocation1 [shape = 'u32[72,128]{1,0:T(1,128)}', space=vmem, size = 0x9000, scoped, tag = 'internal scratch']
  #allocation2 [shape = 'f32[1,1]{1,0:T(1,128)S(1)}', space=vmem, size = 0x200, scoped, tag = 'scoped memory for tpu_custom_call.1']
  %s0 = inlined_call_operand.vmem [shape: bf16[2,4,256], index: 0, kind: input, shape index: {}]
  %s1 = inlined_call_operand.vmem [shape: bf16[16,4], index: 1, kind: input, shape index: {}]
  %s2 = inlined_call_operand.vmem [shape: bf16[16,4], index: 2, kind: input, shape index: {}]
  %s3 = inlined_call_operand.vmem [shape: f32[16,1], index: 3, kind: input, shape index: {}]
  %s4 = inlined_call_operand.vmem [shape: bf16[4,32,16], index: 4, kind: input, shape index: {}]
  %s5 = inlined_call_operand.vmem [shape: bf16[4,32,16], index: 5, kind: input, shape index: {}]
  %s6 = inlined_call_operand.vmem [shape: f32[4,32,1], index: 6, kind: input, shape index: {}]
  %s7 = inlined_call_operand.vmem [shape: bf16[4,16,16], index: 7, kind: input, shape index: {}]
  %s8 = inlined_call_operand.vmem [shape: f32[16,1], index: 8, kind: input, shape index: {}]
  %s9 = inlined_call_operand.vmem [shape: bf16[16,16], index: 9, kind: input, shape index: {}]
  %s10 = inlined_call_operand.vmem [shape: f32[16,1], index: 10, kind: input, shape index: {}]
  %s11 = inlined_call_operand.vmem [shape: bf16[16,1], index: 11, kind: input, shape index: {}]
  %s12 = inlined_call_operand.<no memory space> [shape: f32[1,1], index: 12, kind: input, shape index: {}]
  %s13 = inlined_call_operand.hbm [shape: f32[2,1,256], index: 13, kind: output, shape index: {}]
  %s14 = sld [smem:[#allocation0]]
  $region85: #{tpu_custom_call.1} parent=0
    _
  %s16 = ssub.s32 1, %s14
  %s17 = scalar_select 0, %s16, %s14
  %v18 = vstv %s12
  %19 = vst [vmem:[#allocation2] sm:$0x1] %v18
  $region1: #{tpu_custom_call.1} parent=0
    #allocation3 [shape = 'u8[2048]{0}', space=vmem, size = 0x800, scoped, tag = 'output window, operand 0']
    #allocation4 [shape = 's32[2]{0}', space=sflag, size = 0x8, scoped, tag = 'scoped memory for tpu_custom_call.1']
    %20 = vsyncpa [#allocation4], 0
    %s21 = scalar_lea.sflag [#allocation4], 1
    %22 = vsyncpa %s21, 0
    loop: start=0, step=1, limit=4
    $region2: #{tpu_custom_call.1} parent=1 // loop_pre_header
      _
    $region3: #{tpu_custom_call.1} parent=1 // loop_header
      %s24 = sphi 0, %s28
      %p25 = scmp.ge.s32.totalorder %s24, 4
      %s34 = sphi 0, %s36
      %s37 = sphi 0, %s34
      %s38 = sphi 0, %s37
      %s54 = sphi 0, %s38
      %s58 = sphi 0, %s58
      %s60 = sphi 0, %s58
      %s61 = sphi 0, %s60
      %s75 = sphi 0, %s61
      %s79 = sphi 0, %s79
      %s81 = sphi 0, %s79
      %s82 = sphi 0, %s81
      %s96 = sphi 0, %s82
      %s100 = sphi 0, %s100
      %s102 = sphi 0, %s100
      %s103 = sphi 0, %s102
      %s117 = sphi 0, %s103
      %s121 = sphi 0, %s121
      %s123 = sphi 0, %s121
      %s124 = sphi 0, %s123
      %s138 = sphi 0, %s124
      %s142 = sphi 0, %s142
      %s144 = sphi 0, %s142
      %s145 = sphi 0, %s144
      %s159 = sphi 0, %s145
      %s163 = sphi 0, %s163
      %s165 = sphi 0, %s163
      %s166 = sphi 0, %s165
      %s180 = sphi 0, %s166
      %s184 = sphi 0, %s184
      %s186 = sphi 0, %s184
      %s187 = sphi 0, %s186
      %s201 = sphi 0, %s187
      %s205 = sphi 0, %s205
      %s207 = sphi 0, %s205
      %s208 = sphi 0, %s207
      %s222 = sphi 0, %s208
      %s226 = sphi 0, %s226
      %s228 = sphi 0, %s226
      %s229 = sphi 0, %s228
      %s243 = sphi 0, %s229
      %s247 = sphi 0, %s247
      %s249 = sphi 0, %s247
      %s250 = sphi 0, %s249
      %s264 = sphi 0, %s250
      %s268 = sphi 0, %s268
      %s270 = sphi 0, %s268
      %s271 = sphi 0, %s270
      %s285 = sphi 0, %s271
      %s289 = sphi 0, %s289
      %s291 = sphi 0, %s289
      %s292 = sphi 0, %s291
      %s306 = sphi 0, %s292
      %s312 = sphi 0, %s314
      %s315 = sphi 0, %s312
      %s316 = sphi 0, %s315
      %s332 = sphi 0, %s316
    $region4: #{tpu_custom_call.1} parent=1 // loop_header_branch
      %27 = sbr.rel (%p25) target = $region8
    $region5: #{tpu_custom_call.1} parent=1 // loop_body
      %s29 = ssub.s32 %s24, 1
      %s30 = ssub.s32 %s24, 2
      %s31 = sadd.s32 %s24, 1
      %s32 = ssub.s32 %s24, %s31
      %p33 = scmp.eq.s32.totalorder %s32, 0
      %s35 = sadd.s32 %s34, 1
      %s36 = scalar_select %p33, %s34, %s35
      %p39 = pneg %p33
      %p40 = scmp.eq.s32.totalorder %s24, 1
      %p41 = por %p39, %p40
      %p42 = scmp.ne.s32.totalorder %s34, %s37
      %p43 = scmp.eq.s32.totalorder %s24, 0
      %p44 = por %p42, %p43
      %p45 = scmp.ne.s32.totalorder %s34, %s37
      %p46 = scmp.eq.s32.totalorder %s29, 1
      %p47 = por %p45, %p46
      %p48 = scmp.ne.s32.totalorder %s37, %s38
      %p49 = scmp.eq.s32.totalorder %s29, 0
      %p50 = por %p48, %p49
      %p51 = scmp.ne.s32.totalorder %s37, %s38
      %p52 = scmp.eq.s32.totalorder %s30, 1
      %p53 = por %p51, %p52
      %p55 = scmp.ne.s32.totalorder %s38, %s54
      %p56 = scmp.eq.s32.totalorder %s30, 0
      %p57 = por %p55, %p56
      %s59 = sadd.s32 %s58, 1
      %p62 = scmp.eq.s32.totalorder %s24, 1
      %p63 = scmp.ne.s32.totalorder %s58, %s60
      %p64 = scmp.eq.s32.totalorder %s24, 0
      %p65 = por %p63, %p64
      %p66 = scmp.ne.s32.totalorder %s58, %s60
      %p67 = scmp.eq.s32.totalorder %s29, 1
      %p68 = por %p66, %p67
      %p69 = scmp.ne.s32.totalorder %s60, %s61
      %p70 = scmp.eq.s32.totalorder %s29, 0
      %p71 = por %p69, %p70
      %p72 = scmp.ne.s32.totalorder %s60, %s61
      %p73 = scmp.eq.s32.totalorder %s30, 1
      %p74 = por %p72, %p73
      %p76 = scmp.ne.s32.totalorder %s61, %s75
      %p77 = scmp.eq.s32.totalorder %s30, 0
      %p78 = por %p76, %p77
      %s80 = sadd.s32 %s79, 1
      %p83 = scmp.eq.s32.totalorder %s24, 1
      %p84 = scmp.ne.s32.totalorder %s79, %s81
      %p85 = scmp.eq.s32.totalorder %s24, 0
      %p86 = por %p84, %p85
      %p87 = scmp.ne.s32.totalorder %s79, %s81
      %p88 = scmp.eq.s32.totalorder %s29, 1
      %p89 = por %p87, %p88
      %p90 = scmp.ne.s32.totalorder %s81, %s82
      %p91 = scmp.eq.s32.totalorder %s29, 0
      %p92 = por %p90, %p91
      %p93 = scmp.ne.s32.totalorder %s81, %s82
      %p94 = scmp.eq.s32.totalorder %s30, 1
      %p95 = por %p93, %p94
      %p97 = scmp.ne.s32.totalorder %s82, %s96
      %p98 = scmp.eq.s32.totalorder %s30, 0
      %p99 = por %p97, %p98
      %s101 = sadd.s32 %s100, 1
      %p104 = scmp.eq.s32.totalorder %s24, 1
      %p105 = scmp.ne.s32.totalorder %s100, %s102
      %p106 = scmp.eq.s32.totalorder %s24, 0
      %p107 = por %p105, %p106
      %p108 = scmp.ne.s32.totalorder %s100, %s102
      %p109 = scmp.eq.s32.totalorder %s29, 1
      %p110 = por %p108, %p109
      %p111 = scmp.ne.s32.totalorder %s102, %s103
      %p112 = scmp.eq.s32.totalorder %s29, 0
      %p113 = por %p111, %p112
      %p114 = scmp.ne.s32.totalorder %s102, %s103
      %p115 = scmp.eq.s32.totalorder %s30, 1
      %p116 = por %p114, %p115
      %p118 = scmp.ne.s32.totalorder %s103, %s117
      %p119 = scmp.eq.s32.totalorder %s30, 0
      %p120 = por %p118, %p119
      %s122 = sadd.s32 %s121, 1
      %p125 = scmp.eq.s32.totalorder %s24, 1
      %p126 = scmp.ne.s32.totalorder %s121, %s123
      %p127 = scmp.eq.s32.totalorder %s24, 0
      %p128 = por %p126, %p127
      %p129 = scmp.ne.s32.totalorder %s121, %s123
      %p130 = scmp.eq.s32.totalorder %s29, 1
      %p131 = por %p129, %p130
      %p132 = scmp.ne.s32.totalorder %s123, %s124
      %p133 = scmp.eq.s32.totalorder %s29, 0
      %p134 = por %p132, %p133
      %p135 = scmp.ne.s32.totalorder %s123, %s124
      %p136 = scmp.eq.s32.totalorder %s30, 1
      %p137 = por %p135, %p136
      %p139 = scmp.ne.s32.totalorder %s124, %s138
      %p140 = scmp.eq.s32.totalorder %s30, 0
      %p141 = por %p139, %p140
      %s143 = sadd.s32 %s142, 1
      %p146 = scmp.eq.s32.totalorder %s24, 1
      %p147 = scmp.ne.s32.totalorder %s142, %s144
      %p148 = scmp.eq.s32.totalorder %s24, 0
      %p149 = por %p147, %p148
      %p150 = scmp.ne.s32.totalorder %s142, %s144
      %p151 = scmp.eq.s32.totalorder %s29, 1
      %p152 = por %p150, %p151
      %p153 = scmp.ne.s32.totalorder %s144, %s145
      %p154 = scmp.eq.s32.totalorder %s29, 0
      %p155 = por %p153, %p154
      %p156 = scmp.ne.s32.totalorder %s144, %s145
      %p157 = scmp.eq.s32.totalorder %s30, 1
      %p158 = por %p156, %p157
      %p160 = scmp.ne.s32.totalorder %s145, %s159
      %p161 = scmp.eq.s32.totalorder %s30, 0
      %p162 = por %p160, %p161
      %s164 = sadd.s32 %s163, 1
      %p167 = scmp.eq.s32.totalorder %s24, 1
      %p168 = scmp.ne.s32.totalorder %s163, %s165
      %p169 = scmp.eq.s32.totalorder %s24, 0
      %p170 = por %p168, %p169
      %p171 = scmp.ne.s32.totalorder %s163, %s165
      %p172 = scmp.eq.s32.totalorder %s29, 1
      %p173 = por %p171, %p172
      %p174 = scmp.ne.s32.totalorder %s165, %s166
      %p175 = scmp.eq.s32.totalorder %s29, 0
      %p176 = por %p174, %p175
      %p177 = scmp.ne.s32.totalorder %s165, %s166
      %p178 = scmp.eq.s32.totalorder %s30, 1
      %p179 = por %p177, %p178
      %p181 = scmp.ne.s32.totalorder %s166, %s180
      %p182 = scmp.eq.s32.totalorder %s30, 0
      %p183 = por %p181, %p182
      %s185 = sadd.s32 %s184, 1
      %p188 = scmp.eq.s32.totalorder %s24, 1
      %p189 = scmp.ne.s32.totalorder %s184, %s186
      %p190 = scmp.eq.s32.totalorder %s24, 0
      %p191 = por %p189, %p190
      %p192 = scmp.ne.s32.totalorder %s184, %s186
      %p193 = scmp.eq.s32.totalorder %s29, 1
      %p194 = por %p192, %p193
      %p195 = scmp.ne.s32.totalorder %s186, %s187
      %p196 = scmp.eq.s32.totalorder %s29, 0
      %p197 = por %p195, %p196
      %p198 = scmp.ne.s32.totalorder %s186, %s187
      %p199 = scmp.eq.s32.totalorder %s30, 1
      %p200 = por %p198, %p199
      %p202 = scmp.ne.s32.totalorder %s187, %s201
      %p203 = scmp.eq.s32.totalorder %s30, 0
      %p204 = por %p202, %p203
      %s206 = sadd.s32 %s205, 1
      %p209 = scmp.eq.s32.totalorder %s24, 1
      %p210 = scmp.ne.s32.totalorder %s205, %s207
      %p211 = scmp.eq.s32.totalorder %s24, 0
      %p212 = por %p210, %p211
      %p213 = scmp.ne.s32.totalorder %s205, %s207
      %p214 = scmp.eq.s32.totalorder %s29, 1
      %p215 = por %p213, %p214
      %p216 = scmp.ne.s32.totalorder %s207, %s208
      %p217 = scmp.eq.s32.totalorder %s29, 0
      %p218 = por %p216, %p217
      %p219 = scmp.ne.s32.totalorder %s207, %s208
      %p220 = scmp.eq.s32.totalorder %s30, 1
      %p221 = por %p219, %p220
      %p223 = scmp.ne.s32.totalorder %s208, %s222
      %p224 = scmp.eq.s32.totalorder %s30, 0
      %p225 = por %p223, %p224
      %s227 = sadd.s32 %s226, 1
      %p230 = scmp.eq.s32.totalorder %s24, 1
      %p231 = scmp.ne.s32.totalorder %s226, %s228
      %p232 = scmp.eq.s32.totalorder %s24, 0
      %p233 = por %p231, %p232
      %p234 = scmp.ne.s32.totalorder %s226, %s228
      %p235 = scmp.eq.s32.totalorder %s29, 1
      %p236 = por %p234, %p235
      %p237 = scmp.ne.s32.totalorder %s228, %s229
      %p238 = scmp.eq.s32.totalorder %s29, 0
      %p239 = por %p237, %p238
      %p240 = scmp.ne.s32.totalorder %s228, %s229
      %p241 = scmp.eq.s32.totalorder %s30, 1
      %p242 = por %p240, %p241
      %p244 = scmp.ne.s32.totalorder %s229, %s243
      %p245 = scmp.eq.s32.totalorder %s30, 0
      %p246 = por %p244, %p245
      %s248 = sadd.s32 %s247, 1
      %p251 = scmp.eq.s32.totalorder %s24, 1
      %p252 = scmp.ne.s32.totalorder %s247, %s249
      %p253 = scmp.eq.s32.totalorder %s24, 0
      %p254 = por %p252, %p253
      %p255 = scmp.ne.s32.totalorder %s247, %s249
      %p256 = scmp.eq.s32.totalorder %s29, 1
      %p257 = por %p255, %p256
      %p258 = scmp.ne.s32.totalorder %s249, %s250
      %p259 = scmp.eq.s32.totalorder %s29, 0
      %p260 = por %p258, %p259
      %p261 = scmp.ne.s32.totalorder %s249, %s250
      %p262 = scmp.eq.s32.totalorder %s30, 1
      %p263 = por %p261, %p262
      %p265 = scmp.ne.s32.totalorder %s250, %s264
      %p266 = scmp.eq.s32.totalorder %s30, 0
      %p267 = por %p265, %p266
      %s269 = sadd.s32 %s268, 1
      %p272 = scmp.eq.s32.totalorder %s24, 1
      %p273 = scmp.ne.s32.totalorder %s268, %s270
      %p274 = scmp.eq.s32.totalorder %s24, 0
      %p275 = por %p273, %p274
      %p276 = scmp.ne.s32.totalorder %s268, %s270
      %p277 = scmp.eq.s32.totalorder %s29, 1
      %p278 = por %p276, %p277
      %p279 = scmp.ne.s32.totalorder %s270, %s271
      %p280 = scmp.eq.s32.totalorder %s29, 0
      %p281 = por %p279, %p280
      %p282 = scmp.ne.s32.totalorder %s270, %s271
      %p283 = scmp.eq.s32.totalorder %s30, 1
      %p284 = por %p282, %p283
      %p286 = scmp.ne.s32.totalorder %s271, %s285
      %p287 = scmp.eq.s32.totalorder %s30, 0
      %p288 = por %p286, %p287
      %s290 = sadd.s32 %s289, 1
      %p293 = scmp.eq.s32.totalorder %s24, 1
      %p294 = scmp.ne.s32.totalorder %s289, %s291
      %p295 = scmp.eq.s32.totalorder %s24, 0
      %p296 = por %p294, %p295
      %p297 = scmp.ne.s32.totalorder %s289, %s291
      %p298 = scmp.eq.s32.totalorder %s29, 1
      %p299 = por %p297, %p298
      %p300 = scmp.ne.s32.totalorder %s291, %s292
      %p301 = scmp.eq.s32.totalorder %s29, 0
      %p302 = por %p300, %p301
      %p303 = scmp.ne.s32.totalorder %s291, %s292
      %p304 = scmp.eq.s32.totalorder %s30, 1
      %p305 = por %p303, %p304
      %p307 = scmp.ne.s32.totalorder %s292, %s306
      %p308 = scmp.eq.s32.totalorder %s30, 0
      %p309 = por %p307, %p308
      %s310 = ssub.s32 %s24, %s31
      %p311 = scmp.eq.s32.totalorder %s310, 0
      %s313 = sadd.s32 %s312, 1
      %s314 = scalar_select %p311, %s312, %s313
      %p317 = pneg %p311
      %p318 = scmp.eq.s32.totalorder %s24, 1
      %p319 = por %p317, %p318
      %p320 = scmp.ne.s32.totalorder %s312, %s315
      %p321 = scmp.eq.s32.totalorder %s24, 0
      %p322 = por %p320, %p321
      %p323 = scmp.ne.s32.totalorder %s312, %s315
      %p324 = scmp.eq.s32.totalorder %s29, 1
      %p325 = por %p323, %p324
      %p326 = scmp.ne.s32.totalorder %s315, %s316
      %p327 = scmp.eq.s32.totalorder %s29, 0
      %p328 = por %p326, %p327
      %p329 = scmp.ne.s32.totalorder %s315, %s316
      %p330 = scmp.eq.s32.totalorder %s30, 1
      %p331 = por %p329, %p330
      %p333 = scmp.ne.s32.totalorder %s316, %s332
      %p334 = scmp.eq.s32.totalorder %s30, 0
      %p335 = por %p333, %p334
      %p336 = scmp.le.s32.totalorder 1, %s24
      %p337 = scmp.lt.s32.totalorder %s24, 3
      %p338 = pnand %p336, %p337
      %p339 = pneg %p338
      // Predicated region
      $region9: #{tpu_custom_call.1} parent=5 // pred_check
        _
      $region10: #{tpu_custom_call.1} parent=5 // pred_check_branch
        %341 = sbr.rel (%p338) target = $region12
      $region11: #{tpu_custom_call.1} parent=5 // pred_region
        %s342 = ssub.s32 %s24, 1
        // Predicated region
        $region13: #{tpu_custom_call.1} parent=11 // pred_check
          %p343 = pneg %p71
        $region14: #{tpu_custom_call.1} parent=11 // pred_check_branch
          %345 = sbr.rel (%p343) target = $region16
        $region15: #{tpu_custom_call.1} parent=11 // pred_region
          _
        $region16: #{tpu_custom_call.1} parent=11 // pred_fallthru
          _
        // Predicated region
        $region17: #{tpu_custom_call.1} parent=11 // pred_check
          %p346 = pneg %p92
        $region18: #{tpu_custom_call.1} parent=11 // pred_check_branch
          %348 = sbr.rel (%p346) target = $region20
        $region19: #{tpu_custom_call.1} parent=11 // pred_region
          _
        $region20: #{tpu_custom_call.1} parent=11 // pred_fallthru
          _
        // Predicated region
        $region21: #{tpu_custom_call.1} parent=11 // pred_check
          %p349 = pneg %p113
        $region22: #{tpu_custom_call.1} parent=11 // pred_check_branch
          %351 = sbr.rel (%p349) target = $region24
        $region23: #{tpu_custom_call.1} parent=11 // pred_region
          _
        $region24: #{tpu_custom_call.1} parent=11 // pred_fallthru
          _
        // Predicated region
        $region25: #{tpu_custom_call.1} parent=11 // pred_check
          %p352 = pneg %p134
        $region26: #{tpu_custom_call.1} parent=11 // pred_check_branch
          %354 = sbr.rel (%p352) target = $region28
        $region27: #{tpu_custom_call.1} parent=11 // pred_region
          _
        $region28: #{tpu_custom_call.1} parent=11 // pred_fallthru
          _
        // Predicated region
        $region29: #{tpu_custom_call.1} parent=11 // pred_check
          %p355 = pneg %p155
        $region30: #{tpu_custom_call.1} parent=11 // pred_check_branch
          %357 = sbr.rel (%p355) target = $region32
        $region31: #{tpu_custom_call.1} parent=11 // pred_region
          _
        $region32: #{tpu_custom_call.1} parent=11 // pred_fallthru
          _
        // Predicated region
        $region33: #{tpu_custom_call.1} parent=11 // pred_check
          %p358 = pneg %p176
        $region34: #{tpu_custom_call.1} parent=11 // pred_check_branch
          %360 = sbr.rel (%p358) target = $region36
        $region35: #{tpu_custom_call.1} parent=11 // pred_region
          _
        $region36: #{tpu_custom_call.1} parent=11 // pred_fallthru
          _
        // Predicated region
        $region37: #{tpu_custom_call.1} parent=11 // pred_check
          %p361 = pneg %p197
        $region38: #{tpu_custom_call.1} parent=11 // pred_check_branch
          %363 = sbr.rel (%p361) target = $region40
        $region39: #{tpu_custom_call.1} parent=11 // pred_region
          _
        $region40: #{tpu_custom_call.1} parent=11 // pred_fallthru
          _
        // Predicated region
        $region41: #{tpu_custom_call.1} parent=11 // pred_check
          %p364 = pneg %p218
        $region42: #{tpu_custom_call.1} parent=11 // pred_check_branch
          %366 = sbr.rel (%p364) target = $region44
        $region43: #{tpu_custom_call.1} parent=11 // pred_region
          _
        $region44: #{tpu_custom_call.1} parent=11 // pred_fallthru
          _
        // Predicated region
        $region45: #{tpu_custom_call.1} parent=11 // pred_check
          %p367 = pneg %p239
        $region46: #{tpu_custom_call.1} parent=11 // pred_check_branch
          %369 = sbr.rel (%p367) target = $region48
        $region47: #{tpu_custom_call.1} parent=11 // pred_region
          _
        $region48: #{tpu_custom_call.1} parent=11 // pred_fallthru
          _
        // Predicated region
        $region49: #{tpu_custom_call.1} parent=11 // pred_check
          %p370 = pneg %p260
        $region50: #{tpu_custom_call.1} parent=11 // pred_check_branch
          %372 = sbr.rel (%p370) target = $region52
        $region51: #{tpu_custom_call.1} parent=11 // pred_region
          _
        $region52: #{tpu_custom_call.1} parent=11 // pred_fallthru
          _
        // Predicated region
        $region53: #{tpu_custom_call.1} parent=11 // pred_check
          %p373 = pneg %p281
        $region54: #{tpu_custom_call.1} parent=11 // pred_check_branch
          %375 = sbr.rel (%p373) target = $region56
        $region55: #{tpu_custom_call.1} parent=11 // pred_region
          _
        $region56: #{tpu_custom_call.1} parent=11 // pred_fallthru
          _
        // Predicated region
        $region57: #{tpu_custom_call.1} parent=11 // pred_check
          %p376 = pneg %p302
        $region58: #{tpu_custom_call.1} parent=11 // pred_check_branch
          %378 = sbr.rel (%p376) target = $region60
        $region59: #{tpu_custom_call.1} parent=11 // pred_region
          _
        $region60: #{tpu_custom_call.1} parent=11 // pred_fallthru
          _
      $region12: #{tpu_custom_call.1} parent=5 // pred_fallthru
        _
      %p379 = scmp.lt.s32.totalorder %s24, 2
      // Predicated region
      $region61: #{tpu_custom_call.1} parent=5 // pred_check
        %p380 = pneg %p379
      $region62: #{tpu_custom_call.1} parent=5 // pred_check_branch
        %382 = sbr.rel (%p380) target = $region64
      $region63: #{tpu_custom_call.1} parent=5 // pred_region
        // Predicated region
        $region65: #{tpu_custom_call.1} parent=63 // pred_check
          %p383 = pneg %p44
        $region66: #{tpu_custom_call.1} parent=63 // pred_check_branch
          %385 = sbr.rel (%p383) target = $region68
        $region67: #{tpu_custom_call.1} parent=63 // pred_region
          %p386 = scmp.lt.s32.totalorder %s24, 1
          %s387 = scalar_select %p386, %s24, 1
          %s388 = smul.addr %s387, 2
          %s389 = smul.addr %s388, 2
          %s390 = scalar_lea.vmem %s0, %s389
        $region68: #{tpu_custom_call.1} parent=63 // pred_fallthru
          _
      $region64: #{tpu_custom_call.1} parent=5 // pred_fallthru
        _
      %p391 = scmp.le.s32.totalorder 1, %s24
      %p392 = scmp.lt.s32.totalorder %s24, 3
      %p393 = pnand %p391, %p392
      %p394 = pneg %p393
      // Predicated region
      $region69: #{tpu_custom_call.1} parent=5 // pred_check
        _
      $region70: #{tpu_custom_call.1} parent=5 // pred_check_branch
        %396 = sbr.rel (%p393) target = $region72
      $region71: #{tpu_custom_call.1} parent=5 // pred_region
        %s397 = ssub.s32 %s24, 1
        %p398 = scmp.lt.s32.totalorder %s29, 1
        %s399 = scalar_select %p398, %s29, 1
        %s400 = smul.addr %s399, 2
        %s401 = smul.addr %s400, 2
        %s402 = scalar_lea.vmem %s0, %s401
        %p403 = pneg %p50
        %p404 = pneg %p47
        %p405 = pneg %p71
        %p406 = pneg %p68
        %p407 = pneg %p92
        %p408 = pneg %p89
        %p409 = pneg %p113
        %p410 = pneg %p110
        %p411 = pneg %p134
        %p412 = pneg %p131
        %p413 = pneg %p155
        %p414 = pneg %p152
        %p415 = pneg %p176
        %p416 = pneg %p173
        %p417 = pneg %p197
        %p418 = pneg %p194
        %p419 = pneg %p218
        %p420 = pneg %p215
        %p421 = pneg %p239
        %p422 = pneg %p236
        %p423 = pneg %p260
        %p424 = pneg %p257
        %p425 = pneg %p281
        %p426 = pneg %p278
        %p427 = pneg %p302
        %p428 = pneg %p299
        %p429 = pneg %p328
        %p430 = pneg %p325
        %s431 = sand.u32 %s315, 1
        %s432 = scalar_lea.sflag [#allocation4], %s431
        %s433 = sand.u32 %s315, 1
        %s434 = smul.addr %s433, 2
        %s435 = scalar_lea.vmem [#allocation3], %s434
        %p436 = scmp.lt.s32.totalorder %s29, 1
        %s437 = scalar_select %p436, %s29, 1
        %s438 = smul.addr %s437, 2
        %s439 = smul.addr %s438, 2
        %s440 = scalar_lea.vmem %s0, %s439
        %v441 = vld [vmem:[%s440] sm:$0xf]
        %v442 = vunpack.c.l.bf16 %v441
        %v443 = vlaneseq
        %v444 = vand.u32 %v443, 127
        %v445 = vadd.s32 %v444, 128
        %vm446 = vcmp.lt.s32.totalorder %v444, 0
        %v447 = vsub.s32 0, %v444
        %v448 = vsel %vm446, %v447, %v444
        %v449 = vshrl.u32 %v448, 7
        %v450 = vand.u32 %v448, 127
        %v451 = vsub.s32 0, %v450
        %v452 = vsel %vm446, %v451, %v450
        %vm453 = vcmp.lt.s32.totalorder %v445, 0
        %v454 = vsub.s32 0, %v445
        %v455 = vsel %vm453, %v454, %v445
        %v456 = vshrl.u32 %v455, 7
        %v457 = vand.u32 %v455, 127
        %v458 = vsub.s32 0, %v457
        %v459 = vsel %vm453, %v458, %v457
        %vm460 = vcmp.ne.s32.totalorder %v452, 0
        %vm461 = vcmp.ne.s32.totalorder %v459, 0
        %vm462 = vcmp.lt.s32.totalorder %v452, 0
        %vm463 = vcmp.lt.s32.totalorder %v459, 0
        %vm464 = vmand %vm462, %vm460
        %vm465 = vmand %vm463, %vm461
        %v466 = vadd.s32 %v452, 128
        %v467 = vadd.s32 %v459, 128
        %v468 = vsel %vm464, %v466, %v452
        %v469 = vsel %vm465, %v467, %v459
        %v470 = vld [vmem:[%s1] sm:$0xf]
        %v471 = vld [vmem:[%s1 + $0x4] sm:$0xf]
        %v472 = vunpack.c.l.bf16 %v470
        %v473 = vunpack.c.l.bf16 %v471
        %vm474 = vcmp.ge.s32.totalorder %v468, 1
        %vm475 = vcmp.ge.s32.totalorder %v469, 1
        %477 = vst [vmem:[#allocation1] ss:$2 sm:$0xff] %v442
        %v478 = vld.sshfl [vmem:[#allocation1] sm:$0xff pattern:$0x75316420]
        %v479 = vld.sshfl [vmem:[#allocation1 + $0x8] sm:$0xff pattern:$0x75316420]
        %482 = vrot.lane.b32.xlu0 %v478, 1
        %v483 = vpop.permute.xlu0 %482
        %484 = vrot.lane.b32.xlu0 %v479, 1
        %v485 = vpop.permute.xlu0 %484
        %vm486 = vcmp.lt.s32.totalorder %v444, 1
        %v487 = vsel %vm486, %v483, %v485
        %v488 = vsel %vm486, %v485, %v483
        %v489 = vsel %vm474, 1, 0
        %v490 = vsel %vm475, 1, 0
        %vm491 = vcmp.eq.s32.totalorder %v489, 1
        %vm492 = vcmp.eq.s32.totalorder %v490, 1
        %v493 = vsel %vm491, %v488, 0.0
        %v494 = vsel %vm492, %v487, 0.0
        %v495 = vld [vmem:[%s2] sm:$0xf]
        %v496 = vld [vmem:[%s2 + $0x4] sm:$0xf]
        %v497 = vunpack.c.l.bf16 %v495
        %v498 = vunpack.c.l.bf16 %v496
        %499 = vst [vmem:[#allocation1] ss:$2 sm:$0xff] %v442
        %v500 = vld.sshfl [vmem:[#allocation1] sm:$0xff pattern:$0x75316420]
        %v501 = vld.sshfl [vmem:[#allocation1 + $0x8] sm:$0xff pattern:$0x75316420]
        %vm502 = vcmask 31744
        %v504 = vsel %vm502, %v497, 0
        %v507 = vsel %vm502, %v498, 0
        %vm509 = vcmask 1043456
        %v510 = vsel %vm509, %v500, 0
        %v512 = vsel %vm509, %v501, 0
        %514 = vmatpush.msra.mxu0 0.0
        %515 = vmatpush.msra.mxu0 0.0
        %516 = vmatpush.msra.mxu0 0.0
        %517 = vmatpush.msra.mxu0 0.0
        %518 = vmatpush.msra.mxu0 0.0
        %519 = vmatpush.msra.mxu0 0.0
        %520 = vmatpush.msra.mxu0 0.0
        %521 = vmatpush.msra.mxu0 0.0
        %522 = vmatpush.msra.mxu0 0.0
        %523 = vmatpush.msra.mxu0 0.0
        %524 = vmatpush.msra.mxu0 0.0
        %525 = vmatpush.msra.mxu0 0.0
        %526 = vmatpush.msra.mxu0 0.0
        %527 = vmatpush.msra.mxu0 0.0
        %528 = vmatpush.msra.mxu0 0.0
        %529 = vmatpush.msra.mxu0 %v510
        %530 = vmatmul.f32.gmra.mxu0 %v504
        %v531 = vpop.f32.mrf.mxu0
        %v532 = vadd.f32 0.0, %v531
        %533 = vmatmul.f32.gmra.mxu0 %v507
        %v534 = vpop.f32.mrf.mxu0
        %v535 = vadd.f32 0.0, %v534
        %536 = vdwg.mxu0
        %537 = vmatpush.msra.mxu0 0.0
        %538 = vmatpush.msra.mxu0 0.0
        %539 = vmatpush.msra.mxu0 0.0
        %540 = vmatpush.msra.mxu0 0.0
        %541 = vmatpush.msra.mxu0 0.0
        %542 = vmatpush.msra.mxu0 0.0
        %543 = vmatpush.msra.mxu0 0.0
        %544 = vmatpush.msra.mxu0 0.0
        %545 = vmatpush.msra.mxu0 0.0
        %546 = vmatpush.msra.mxu0 0.0
        %547 = vmatpush.msra.mxu0 0.0
        %548 = vmatpush.msra.mxu0 0.0
        %549 = vmatpush.msra.mxu0 0.0
        %550 = vmatpush.msra.mxu0 0.0
        %551 = vmatpush.msra.mxu0 0.0
        %552 = vmatpush.msra.mxu0 %v512
        %553 = vmatmul.f32.gmra.mxu0 %v504
        %v554 = vpop.f32.mrf.mxu0
        %v555 = vadd.f32 0.0, %v554
        %556 = vmatmul.f32.gmra.mxu0 %v507
        %v557 = vpop.f32.mrf.mxu0
        %v558 = vadd.f32 0.0, %v557
        %559 = vdwg.mxu0
        %v561 = vsel %vm502, %v472, 0
        %v564 = vsel %vm502, %v473, 0
        %v567 = vsel %vm509, %v493, 0
        %v570 = vsel %vm509, %v494, 0
        %572 = vmatpush.msra.mxu0 0.0
        %573 = vmatpush.msra.mxu0 0.0
        %574 = vmatpush.msra.mxu0 0.0
        %575 = vmatpush.msra.mxu0 0.0
        %576 = vmatpush.msra.mxu0 0.0
        %577 = vmatpush.msra.mxu0 0.0
        %578 = vmatpush.msra.mxu0 0.0
        %579 = vmatpush.msra.mxu0 0.0
        %580 = vmatpush.msra.mxu0 0.0
        %581 = vmatpush.msra.mxu0 0.0
        %582 = vmatpush.msra.mxu0 0.0
        %583 = vmatpush.msra.mxu0 0.0
        %584 = vmatpush.msra.mxu0 0.0
        %585 = vmatpush.msra.mxu0 0.0
        %586 = vmatpush.msra.mxu0 0.0
        %587 = vmatpush.msra.mxu0 %v567
        %588 = vmatmul.f32.gmra.mxu0 %v561
        %v589 = vpop.f32.mrf.mxu0
        %v590 = vadd.f32 %v532, %v589
        %591 = vmatmul.f32.gmra.mxu0 %v564
        %v592 = vpop.f32.mrf.mxu0
        %v593 = vadd.f32 %v535, %v592
        %594 = vdwg.mxu0
        %595 = vmatpush.msra.mxu0 0.0
        %596 = vmatpush.msra.mxu0 0.0
        %597 = vmatpush.msra.mxu0 0.0
        %598 = vmatpush.msra.mxu0 0.0
        %599 = vmatpush.msra.mxu0 0.0
        %600 = vmatpush.msra.mxu0 0.0
        %601 = vmatpush.msra.mxu0 0.0
        %602 = vmatpush.msra.mxu0 0.0
        %603 = vmatpush.msra.mxu0 0.0
        %604 = vmatpush.msra.mxu0 0.0
        %605 = vmatpush.msra.mxu0 0.0
        %606 = vmatpush.msra.mxu0 0.0
        %607 = vmatpush.msra.mxu0 0.0
        %608 = vmatpush.msra.mxu0 0.0
        %609 = vmatpush.msra.mxu0 0.0
        %610 = vmatpush.msra.mxu0 %v570
        %611 = vmatmul.f32.gmra.mxu0 %v561
        %v612 = vpop.f32.mrf.mxu0
        %v613 = vadd.f32 %v555, %v612
        %614 = vmatmul.f32.gmra.mxu0 %v564
        %v615 = vpop.f32.mrf.mxu0
        %v616 = vadd.f32 %v558, %v615
        %617 = vdwg.mxu0
        %v618 = vld [vmem:[%s3] sm:$0xff]
        %v619 = vld [vmem:[%s3 + $0x8] sm:$0xff]
        %621 = vset.pattern.permute.xlu0 0
        %622 = vperm.xlu0 %621, %v618
        %v623 = vpop.permute.xlu0 %622
        %626 = vset.pattern.permute.xlu0 0
        %627 = vperm.xlu0 %626, %v619
        %v628 = vpop.permute.xlu0 %627
        %v630 = vadd.f32 %v590, %v623
        %v631 = vadd.f32 %v613, %v623
        %v632 = vadd.f32 %v593, %v628
        %v633 = vadd.f32 %v616, %v628
        %634 = vrot.lane.b32.xlu0 %v630, 1
        %v635 = vpop.permute.xlu0 %634
        %636 = vrot.lane.b32.xlu0 %v632, 1
        %v637 = vpop.permute.xlu0 %636
        %638 = vrot.lane.b32.xlu0 %v631, 1
        %v639 = vpop.permute.xlu0 %638
        %640 = vrot.lane.b32.xlu0 %v633, 1
        %v641 = vpop.permute.xlu0 %640
        %v642 = vsel %vm486, %v635, %v639
        %v643 = vsel %vm486, %v637, %v641
        %v644 = vsel %vm486, %v639, %v635
        %v645 = vsel %vm486, %v641, %v637
        %v646 = vsel %vm491, %v644, 0.0
        %v647 = vsel %vm492, %v642, 0.0
        %v648 = vsel %vm491, %v645, 0.0
        %v649 = vsel %vm492, %v643, 0.0
        %v650 = vld [vmem:[%s4] sm:$0xf]
        %v651 = vld [vmem:[%s4 + $0x4] sm:$0xf]
        %v652 = vld [vmem:[%s4 + $0x8] sm:$0xf]
        %v653 = vld [vmem:[%s4 + $0xc] sm:$0xf]
        %v654 = vunpack.c.l.bf16 %v650
        %v655 = vunpack.c.l.bf16 %v651
        %v656 = vunpack.c.l.bf16 %v652
        %v657 = vunpack.c.l.bf16 %v653
        %v658 = vld [vmem:[%s5] sm:$0xf]
        %v659 = vld [vmem:[%s5 + $0x4] sm:$0xf]
        %v660 = vld [vmem:[%s5 + $0x8] sm:$0xf]
        %v661 = vld [vmem:[%s5 + $0xc] sm:$0xf]
        %v662 = vunpack.c.l.bf16 %v658
        %v663 = vunpack.c.l.bf16 %v659
        %v664 = vunpack.c.l.bf16 %v660
        %v665 = vunpack.c.l.bf16 %v661
        %vm666 = vcmask 130048
        %v668 = vsel %vm666, %v662, 0
        %v671 = vsel %vm666, %v663, 0
        %v674 = vsel %vm666, %v664, 0
        %v677 = vsel %vm666, %v665, 0
        %679 = vmatpush.msra.mxu0 0.0
        %680 = vmatpush.msra.mxu0 0.0
        %681 = vmatpush.msra.mxu0 0.0
        %682 = vmatpush.msra.mxu0 0.0
        %683 = vmatpush.msra.mxu0 0.0
        %684 = vmatpush.msra.mxu0 0.0
        %685 = vmatpush.msra.mxu0 0.0
        %686 = vmatpush.msra.mxu0 0.0
        %687 = vmatpush.msra.mxu0 0.0
        %688 = vmatpush.msra.mxu0 0.0
        %689 = vmatpush.msra.mxu0 0.0
        %690 = vmatpush.msra.mxu0 0.0
        %691 = vmatpush.msra.mxu0 0.0
        %692 = vmatpush.msra.mxu0 0.0
        %693 = vmatpush.msra.mxu0 %v632
        %694 = vmatpush.msra.mxu0 %v630
        %695 = vmatmul.f32.gmra.mxu0 %v668
        %v696 = vpop.f32.mrf.mxu0
        %v697 = vadd.f32 0.0, %v696
        %698 = vmatmul.f32.gmra.mxu0 %v671
        %v699 = vpop.f32.mrf.mxu0
        %v700 = vadd.f32 0.0, %v699
        %701 = vmatmul.f32.gmra.mxu0 %v674
        %v702 = vpop.f32.mrf.mxu0
        %v703 = vadd.f32 0.0, %v702
        %704 = vmatmul.f32.gmra.mxu0 %v677
        %v705 = vpop.f32.mrf.mxu0
        %v706 = vadd.f32 0.0, %v705
        %707 = vdwg.mxu0
        %708 = vmatpush.msra.mxu0 0.0
        %709 = vmatpush.msra.mxu0 0.0
        %710 = vmatpush.msra.mxu0 0.0
        %711 = vmatpush.msra.mxu0 0.0
        %712 = vmatpush.msra.mxu0 0.0
        %713 = vmatpush.msra.mxu0 0.0
        %714 = vmatpush.msra.mxu0 0.0
        %715 = vmatpush.msra.mxu0 0.0
        %716 = vmatpush.msra.mxu0 0.0
        %717 = vmatpush.msra.mxu0 0.0
        %718 = vmatpush.msra.mxu0 0.0
        %719 = vmatpush.msra.mxu0 0.0
        %720 = vmatpush.msra.mxu0 0.0
        %721 = vmatpush.msra.mxu0 0.0
        %722 = vmatpush.msra.mxu0 %v633
        %723 = vmatpush.msra.mxu0 %v631
        %724 = vmatmul.f32.gmra.mxu0 %v668
        %v725 = vpop.f32.mrf.mxu0
        %v726 = vadd.f32 0.0, %v725
        %727 = vmatmul.f32.gmra.mxu0 %v671
        %v728 = vpop.f32.mrf.mxu0
        %v729 = vadd.f32 0.0, %v728
        %730 = vmatmul.f32.gmra.mxu0 %v674
        %v731 = vpop.f32.mrf.mxu0
        %v732 = vadd.f32 0.0, %v731
        %733 = vmatmul.f32.gmra.mxu0 %v677
        %v734 = vpop.f32.mrf.mxu0
        %v735 = vadd.f32 0.0, %v734
        %736 = vdwg.mxu0
        %v738 = vsel %vm666, %v654, 0
        %v741 = vsel %vm666, %v655, 0
        %v744 = vsel %vm666, %v656, 0
        %v747 = vsel %vm666, %v657, 0
        %749 = vmatpush.msra.mxu0 0.0
        %750 = vmatpush.msra.mxu0 0.0
        %751 = vmatpush.msra.mxu0 0.0
        %752 = vmatpush.msra.mxu0 0.0
        %753 = vmatpush.msra.mxu0 0.0
        %754 = vmatpush.msra.mxu0 0.0
        %755 = vmatpush.msra.mxu0 0.0
        %756 = vmatpush.msra.mxu0 0.0
        %757 = vmatpush.msra.mxu0 0.0
        %758 = vmatpush.msra.mxu0 0.0
        %759 = vmatpush.msra.mxu0 0.0
        %760 = vmatpush.msra.mxu0 0.0
        %761 = vmatpush.msra.mxu0 0.0
        %762 = vmatpush.msra.mxu0 0.0
        %763 = vmatpush.msra.mxu0 %v648
        %764 = vmatpush.msra.mxu0 %v646
        %765 = vmatmul.f32.gmra.mxu0 %v738
        %v766 = vpop.f32.mrf.mxu0
        %v767 = vadd.f32 %v697, %v766
        %768 = vmatmul.f32.gmra.mxu0 %v741
        %v769 = vpop.f32.mrf.mxu0
        %v770 = vadd.f32 %v700, %v769
        %771 = vmatmul.f32.gmra.mxu0 %v744
        %v772 = vpop.f32.mrf.mxu0
        %v773 = vadd.f32 %v703, %v772
        %774 = vmatmul.f32.gmra.mxu0 %v747
        %v775 = vpop.f32.mrf.mxu0
        %v776 = vadd.f32 %v706, %v775
        %777 = vdwg.mxu0
        %778 = vmatpush.msra.mxu0 0.0
        %779 = vmatpush.msra.mxu0 0.0
        %780 = vmatpush.msra.mxu0 0.0
        %781 = vmatpush.msra.mxu0 0.0
        %782 = vmatpush.msra.mxu0 0.0
        %783 = vmatpush.msra.mxu0 0.0
        %784 = vmatpush.msra.mxu0 0.0
        %785 = vmatpush.msra.mxu0 0.0
        %786 = vmatpush.msra.mxu0 0.0
        %787 = vmatpush.msra.mxu0 0.0
        %788 = vmatpush.msra.mxu0 0.0
        %789 = vmatpush.msra.mxu0 0.0
        %790 = vmatpush.msra.mxu0 0.0
        %791 = vmatpush.msra.mxu0 0.0
        %792 = vmatpush.msra.mxu0 %v649
        %793 = vmatpush.msra.mxu0 %v647
        %794 = vmatmul.f32.gmra.mxu0 %v738
        %v795 = vpop.f32.mrf.mxu0
        %v796 = vadd.f32 %v726, %v795
        %797 = vmatmul.f32.gmra.mxu0 %v741
        %v798 = vpop.f32.mrf.mxu0
        %v799 = vadd.f32 %v729, %v798
        %800 = vmatmul.f32.gmra.mxu0 %v744
        %v801 = vpop.f32.mrf.mxu0
        %v802 = vadd.f32 %v732, %v801
        %803 = vmatmul.f32.gmra.mxu0 %v747
        %v804 = vpop.f32.mrf.mxu0
        %v805 = vadd.f32 %v735, %v804
        %806 = vdwg.mxu0
        %v807 = vld [vmem:[%s6] sm:$0xff]
        %v808 = vld [vmem:[%s6 + $0x8] sm:$0xff]
        %v809 = vld [vmem:[%s6 + $0x10] sm:$0xff]
        %v810 = vld [vmem:[%s6 + $0x18] sm:$0xff]
        %812 = vset.pattern.permute.xlu0 0
        %813 = vperm.xlu0 %812, %v807
        %v814 = vpop.permute.xlu0 %813
        %817 = vset.pattern.permute.xlu0 0
        %818 = vperm.xlu0 %817, %v808
        %v819 = vpop.permute.xlu0 %818
        %822 = vset.pattern.permute.xlu0 0
        %823 = vperm.xlu0 %822, %v809
        %v824 = vpop.permute.xlu0 %823
        %827 = vset.pattern.permute.xlu0 0
        %828 = vperm.xlu0 %827, %v810
        %v829 = vpop.permute.xlu0 %828
        %v831 = vadd.f32 %v767, %v814
        %v832 = vadd.f32 %v796, %v814
        %v833 = vadd.f32 %v770, %v819
        %v834 = vadd.f32 %v799, %v819
        %v835 = vadd.f32 %v773, %v824
        %v836 = vadd.f32 %v802, %v824
        %v837 = vadd.f32 %v776, %v829
        %v838 = vadd.f32 %v805, %v829
        %v839 = vxor.u32 %v835, 2147483648
        %v840 = vxor.u32 %v836, 2147483648
        %v841 = vxor.u32 %v837, 2147483648
        %v842 = vxor.u32 %v838, 2147483648
        %v843 = vmul.f32 %v839, 1.442695
        %v844 = vpow.pop %v843
        %v845 = vmul.f32 %v840, 1.442695
        %v846 = vpow.pop %v845
        %v847 = vmul.f32 %v841, 1.442695
        %v848 = vpow.pop %v847
        %v849 = vmul.f32 %v842, 1.442695
        %v850 = vpow.pop %v849
        %v851 = vadd.f32 %v844, 1.0
        %v852 = vadd.f32 %v846, 1.0
        %v853 = vadd.f32 %v848, 1.0
        %v854 = vadd.f32 %v850, 1.0
        %v855 = vrcp.pop %v851
        %v856 = vmul.f32 %v851, %v855
        %v857 = vsub.f32 1.0, %v856
        %v858 = vmul.f32 %v855, %v857
        %v859 = vadd.f32 %v855, %v858
        %vm860 = vweird.f32 %v851
        %vm861 = vweird.f32 %v855
        %vm862 = vmor %vm860, %vm861
        %v863 = vsel %vm862, %v855, %v859
        %v864 = vand.u32 2147483647, %v851
        %vm865 = vcmp.eq.f32.partialorder %v864, 8.507059e+37
        %v866 = vand.u32 %v851, 2147483648
        %v867 = vor.u32 1.1754944e-38, %v866
        %v868 = vsel %vm865, %v867, %v863
        %v869 = vmul.f32 1.0, %v868
        %v870 = vrcp.pop %v852
        %v871 = vmul.f32 %v852, %v870
        %v872 = vsub.f32 1.0, %v871
        %v873 = vmul.f32 %v870, %v872
        %v874 = vadd.f32 %v870, %v873
        %vm875 = vweird.f32 %v852
        %vm876 = vweird.f32 %v870
        %vm877 = vmor %vm875, %vm876
        %v878 = vsel %vm877, %v870, %v874
        %v879 = vand.u32 2147483647, %v852
        %vm880 = vcmp.eq.f32.partialorder %v879, 8.507059e+37
        %v881 = vand.u32 %v852, 2147483648
        %v882 = vor.u32 1.1754944e-38, %v881
        %v883 = vsel %vm880, %v882, %v878
        %v884 = vmul.f32 1.0, %v883
        %v885 = vrcp.pop %v853
        %v886 = vmul.f32 %v853, %v885
        %v887 = vsub.f32 1.0, %v886
        %v888 = vmul.f32 %v885, %v887
        %v889 = vadd.f32 %v885, %v888
        %vm890 = vweird.f32 %v853
        %vm891 = vweird.f32 %v885
        %vm892 = vmor %vm890, %vm891
        %v893 = vsel %vm892, %v885, %v889
        %v894 = vand.u32 2147483647, %v853
        %vm895 = vcmp.eq.f32.partialorder %v894, 8.507059e+37
        %v896 = vand.u32 %v853, 2147483648
        %v897 = vor.u32 1.1754944e-38, %v896
        %v898 = vsel %vm895, %v897, %v893
        %v899 = vmul.f32 1.0, %v898
        %v900 = vrcp.pop %v854
        %v901 = vmul.f32 %v854, %v900
        %v902 = vsub.f32 1.0, %v901
        %v903 = vmul.f32 %v900, %v902
        %v904 = vadd.f32 %v900, %v903
        %vm905 = vweird.f32 %v854
        %vm906 = vweird.f32 %v900
        %vm907 = vmor %vm905, %vm906
        %v908 = vsel %vm907, %v900, %v904
        %v909 = vand.u32 2147483647, %v854
        %vm910 = vcmp.eq.f32.partialorder %v909, 8.507059e+37
        %v911 = vand.u32 %v854, 2147483648
        %v912 = vor.u32 1.1754944e-38, %v911
        %v913 = vsel %vm910, %v912, %v908
        %v914 = vmul.f32 1.0, %v913
        %v915 = vtanh.pop %v831
        %v916 = vtanh.pop %v832
        %v917 = vtanh.pop %v833
        %v918 = vtanh.pop %v834
        %v919 = vmul.f32 %v869, %v915
        %v920 = vmul.f32 %v884, %v916
        %v921 = vmul.f32 %v899, %v917
        %v922 = vmul.f32 %v914, %v918
        %v923 = vld [vmem:[%s7] sm:$0xf]
        %v924 = vld [vmem:[%s7 + $0x4] sm:$0xf]
        %v925 = vunpack.c.l.bf16 %v923
        %v926 = vunpack.c.l.bf16 %v924
        %v927 = vadd.f32 %v630, %v919
        %v928 = vadd.f32 %v631, %v920
        %v929 = vadd.f32 %v632, %v921
        %v930 = vadd.f32 %v633, %v922
        %vm931 = vcmp.ge.s32.totalorder %v468, 2
        %vm932 = vcmp.ge.s32.totalorder %v469, 2
        %933 = vrot.lane.b32.xlu0 %v927, 2
        %v934 = vpop.permute.xlu0 %933
        %935 = vrot.lane.b32.xlu0 %v929, 2
        %v936 = vpop.permute.xlu0 %935
        %937 = vrot.lane.b32.xlu0 %v928, 2
        %v938 = vpop.permute.xlu0 %937
        %939 = vrot.lane.b32.xlu0 %v930, 2
        %v940 = vpop.permute.xlu0 %939
        %vm941 = vcmp.lt.s32.totalorder %v444, 2
        %v942 = vsel %vm941, %v934, %v938
        %v943 = vsel %vm941, %v936, %v940
        %v944 = vsel %vm941, %v938, %v934
        %v945 = vsel %vm941, %v940, %v936
        %v946 = vsel %vm931, 1, 0
        %v947 = vsel %vm932, 1, 0
        %vm948 = vcmp.eq.s32.totalorder %v946, 1
        %vm949 = vcmp.eq.s32.totalorder %v947, 1
        %v950 = vsel %vm948, %v944, 0.0
        %v951 = vsel %vm949, %v942, 0.0
        %v952 = vsel %vm948, %v945, 0.0
        %v953 = vsel %vm949, %v943, 0.0
        %s954 = scalar_lea.vmem %s4, 16
        %v955 = vld [vmem:[%s954] sm:$0xf]
        %v956 = vld [vmem:[%s954 + $0x4] sm:$0xf]
        %v957 = vld [vmem:[%s954 + $0x8] sm:$0xf]
        %v958 = vld [vmem:[%s954 + $0xc] sm:$0xf]
        %v959 = vunpack.c.l.bf16 %v955
        %v960 = vunpack.c.l.bf16 %v956
        %v961 = vunpack.c.l.bf16 %v957
        %v962 = vunpack.c.l.bf16 %v958
        %s963 = scalar_lea.vmem %s5, 16
        %v964 = vld [vmem:[%s963] sm:$0xf]
        %v965 = vld [vmem:[%s963 + $0x4] sm:$0xf]
        %v966 = vld [vmem:[%s963 + $0x8] sm:$0xf]
        %v967 = vld [vmem:[%s963 + $0xc] sm:$0xf]
        %v968 = vunpack.c.l.bf16 %v964
        %v969 = vunpack.c.l.bf16 %v965
        %v970 = vunpack.c.l.bf16 %v966
        %v971 = vunpack.c.l.bf16 %v967
        %v973 = vsel %vm666, %v968, 0
        %v976 = vsel %vm666, %v969, 0
        %v979 = vsel %vm666, %v970, 0
        %v982 = vsel %vm666, %v971, 0
        %984 = vmatpush.msra.mxu0 0.0
        %985 = vmatpush.msra.mxu0 0.0
        %986 = vmatpush.msra.mxu0 0.0
        %987 = vmatpush.msra.mxu0 0.0
        %988 = vmatpush.msra.mxu0 0.0
        %989 = vmatpush.msra.mxu0 0.0
        %990 = vmatpush.msra.mxu0 0.0
        %991 = vmatpush.msra.mxu0 0.0
        %992 = vmatpush.msra.mxu0 0.0
        %993 = vmatpush.msra.mxu0 0.0
        %994 = vmatpush.msra.mxu0 0.0
        %995 = vmatpush.msra.mxu0 0.0
        %996 = vmatpush.msra.mxu0 0.0
        %997 = vmatpush.msra.mxu0 0.0
        %998 = vmatpush.msra.mxu0 %v929
        %999 = vmatpush.msra.mxu0 %v927
        %1000 = vmatmul.f32.gmra.mxu0 %v973
        %v1001 = vpop.f32.mrf.mxu0
        %v1002 = vadd.f32 0.0, %v1001
        %1003 = vmatmul.f32.gmra.mxu0 %v976
        %v1004 = vpop.f32.mrf.mxu0
        %v1005 = vadd.f32 0.0, %v1004
        %1006 = vmatmul.f32.gmra.mxu0 %v979
        %v1007 = vpop.f32.mrf.mxu0
        %v1008 = vadd.f32 0.0, %v1007
        %1009 = vmatmul.f32.gmra.mxu0 %v982
        %v1010 = vpop.f32.mrf.mxu0
        %v1011 = vadd.f32 0.0, %v1010
        %1012 = vdwg.mxu0
        %1013 = vmatpush.msra.mxu0 0.0
        %1014 = vmatpush.msra.mxu0 0.0
        %1015 = vmatpush.msra.mxu0 0.0
        %1016 = vmatpush.msra.mxu0 0.0
        %1017 = vmatpush.msra.mxu0 0.0
        %1018 = vmatpush.msra.mxu0 0.0
        %1019 = vmatpush.msra.mxu0 0.0
        %1020 = vmatpush.msra.mxu0 0.0
        %1021 = vmatpush.msra.mxu0 0.0
        %1022 = vmatpush.msra.mxu0 0.0
        %1023 = vmatpush.msra.mxu0 0.0
        %1024 = vmatpush.msra.mxu0 0.0
        %1025 = vmatpush.msra.mxu0 0.0
        %1026 = vmatpush.msra.mxu0 0.0
        %1027 = vmatpush.msra.mxu0 %v930
        %1028 = vmatpush.msra.mxu0 %v928
        %1029 = vmatmul.f32.gmra.mxu0 %v973
        %v1030 = vpop.f32.mrf.mxu0
        %v1031 = vadd.f32 0.0, %v1030
        %1032 = vmatmul.f32.gmra.mxu0 %v976
        %v1033 = vpop.f32.mrf.mxu0
        %v1034 = vadd.f32 0.0, %v1033
        %1035 = vmatmul.f32.gmra.mxu0 %v979
        %v1036 = vpop.f32.mrf.mxu0
        %v1037 = vadd.f32 0.0, %v1036
        %1038 = vmatmul.f32.gmra.mxu0 %v982
        %v1039 = vpop.f32.mrf.mxu0
        %v1040 = vadd.f32 0.0, %v1039
        %1041 = vdwg.mxu0
        %v1043 = vsel %vm666, %v959, 0
        %v1046 = vsel %vm666, %v960, 0
        %v1049 = vsel %vm666, %v961, 0
        %v1052 = vsel %vm666, %v962, 0
        %1054 = vmatpush.msra.mxu0 0.0
        %1055 = vmatpush.msra.mxu0 0.0
        %1056 = vmatpush.msra.mxu0 0.0
        %1057 = vmatpush.msra.mxu0 0.0
        %1058 = vmatpush.msra.mxu0 0.0
        %1059 = vmatpush.msra.mxu0 0.0
        %1060 = vmatpush.msra.mxu0 0.0
        %1061 = vmatpush.msra.mxu0 0.0
        %1062 = vmatpush.msra.mxu0 0.0
        %1063 = vmatpush.msra.mxu0 0.0
        %1064 = vmatpush.msra.mxu0 0.0
        %1065 = vmatpush.msra.mxu0 0.0
        %1066 = vmatpush.msra.mxu0 0.0
        %1067 = vmatpush.msra.mxu0 0.0
        %1068 = vmatpush.msra.mxu0 %v952
        %1069 = vmatpush.msra.mxu0 %v950
        %1070 = vmatmul.f32.gmra.mxu0 %v1043
        %v1071 = vpop.f32.mrf.mxu0
        %v1072 = vadd.f32 %v1002, %v1071
        %1073 = vmatmul.f32.gmra.mxu0 %v1046
        %v1074 = vpop.f32.mrf.mxu0
        %v1075 = vadd.f32 %v1005, %v1074
        %1076 = vmatmul.f32.gmra.mxu0 %v1049
        %v1077 = vpop.f32.mrf.mxu0
        %v1078 = vadd.f32 %v1008, %v1077
        %1079 = vmatmul.f32.gmra.mxu0 %v1052
        %v1080 = vpop.f32.mrf.mxu0
        %v1081 = vadd.f32 %v1011, %v1080
        %1082 = vdwg.mxu0
        %1083 = vmatpush.msra.mxu0 0.0
        %1084 = vmatpush.msra.mxu0 0.0
        %1085 = vmatpush.msra.mxu0 0.0
        %1086 = vmatpush.msra.mxu0 0.0
        %1087 = vmatpush.msra.mxu0 0.0
        %1088 = vmatpush.msra.mxu0 0.0
        %1089 = vmatpush.msra.mxu0 0.0
        %1090 = vmatpush.msra.mxu0 0.0
        %1091 = vmatpush.msra.mxu0 0.0
        %1092 = vmatpush.msra.mxu0 0.0
        %1093 = vmatpush.msra.mxu0 0.0
        %1094 = vmatpush.msra.mxu0 0.0
        %1095 = vmatpush.msra.mxu0 0.0
        %1096 = vmatpush.msra.mxu0 0.0
        %1097 = vmatpush.msra.mxu0 %v953
        %1098 = vmatpush.msra.mxu0 %v951
        %1099 = vmatmul.f32.gmra.mxu0 %v1043
        %v1100 = vpop.f32.mrf.mxu0
        %v1101 = vadd.f32 %v1031, %v1100
        %1102 = vmatmul.f32.gmra.mxu0 %v1046
        %v1103 = vpop.f32.mrf.mxu0
        %v1104 = vadd.f32 %v1034, %v1103
        %1105 = vmatmul.f32.gmra.mxu0 %v1049
        %v1106 = vpop.f32.mrf.mxu0
        %v1107 = vadd.f32 %v1037, %v1106
        %1108 = vmatmul.f32.gmra.mxu0 %v1052
        %v1109 = vpop.f32.mrf.mxu0
        %v1110 = vadd.f32 %v1040, %v1109
        %1111 = vdwg.mxu0
        %s1112 = scalar_lea.vmem %s6, 32
        %v1113 = vld [vmem:[%s1112] sm:$0xff]
        %v1114 = vld [vmem:[%s1112 + $0x8] sm:$0xff]
        %v1115 = vld [vmem:[%s1112 + $0x10] sm:$0xff]
        %v1116 = vld [vmem:[%s1112 + $0x18] sm:$0xff]
        %1118 = vset.pattern.permute.xlu0 0
        %1119 = vperm.xlu0 %1118, %v1113
        %v1120 = vpop.permute.xlu0 %1119
        %1123 = vset.pattern.permute.xlu0 0
        %1124 = vperm.xlu0 %1123, %v1114
        %v1125 = vpop.permute.xlu0 %1124
        %1128 = vset.pattern.permute.xlu0 0
        %1129 = vperm.xlu0 %1128, %v1115
        %v1130 = vpop.permute.xlu0 %1129
        %1133 = vset.pattern.permute.xlu0 0
        %1134 = vperm.xlu0 %1133, %v1116
        %v1135 = vpop.permute.xlu0 %1134
        %v1137 = vadd.f32 %v1072, %v1120
        %v1138 = vadd.f32 %v1101, %v1120
        %v1139 = vadd.f32 %v1075, %v1125
        %v1140 = vadd.f32 %v1104, %v1125
        %v1141 = vadd.f32 %v1078, %v1130
        %v1142 = vadd.f32 %v1107, %v1130
        %v1143 = vadd.f32 %v1081, %v1135
        %v1144 = vadd.f32 %v1110, %v1135
        %v1145 = vxor.u32 %v1141, 2147483648
        %v1146 = vxor.u32 %v1142, 2147483648
        %v1147 = vxor.u32 %v1143, 2147483648
        %v1148 = vxor.u32 %v1144, 2147483648
        %v1149 = vmul.f32 %v1145, 1.442695
        %v1150 = vpow.pop %v1149
        %v1151 = vmul.f32 %v1146, 1.442695
        %v1152 = vpow.pop %v1151
        %v1153 = vmul.f32 %v1147, 1.442695
        %v1154 = vpow.pop %v1153
        %v1155 = vmul.f32 %v1148, 1.442695
        %v1156 = vpow.pop %v1155
        %v1157 = vadd.f32 %v1150, 1.0
        %v1158 = vadd.f32 %v1152, 1.0
        %v1159 = vadd.f32 %v1154, 1.0
        %v1160 = vadd.f32 %v1156, 1.0
        %v1161 = vrcp.pop %v1157
        %v1162 = vmul.f32 %v1157, %v1161
        %v1163 = vsub.f32 1.0, %v1162
        %v1164 = vmul.f32 %v1161, %v1163
        %v1165 = vadd.f32 %v1161, %v1164
        %vm1166 = vweird.f32 %v1157
        %vm1167 = vweird.f32 %v1161
        %vm1168 = vmor %vm1166, %vm1167
        %v1169 = vsel %vm1168, %v1161, %v1165
        %v1170 = vand.u32 2147483647, %v1157
        %vm1171 = vcmp.eq.f32.partialorder %v1170, 8.507059e+37
        %v1172 = vand.u32 %v1157, 2147483648
        %v1173 = vor.u32 1.1754944e-38, %v1172
        %v1174 = vsel %vm1171, %v1173, %v1169
        %v1175 = vmul.f32 1.0, %v1174
        %v1176 = vrcp.pop %v1158
        %v1177 = vmul.f32 %v1158, %v1176
        %v1178 = vsub.f32 1.0, %v1177
        %v1179 = vmul.f32 %v1176, %v1178
        %v1180 = vadd.f32 %v1176, %v1179
        %vm1181 = vweird.f32 %v1158
        %vm1182 = vweird.f32 %v1176
        %vm1183 = vmor %vm1181, %vm1182
        %v1184 = vsel %vm1183, %v1176, %v1180
        %v1185 = vand.u32 2147483647, %v1158
        %vm1186 = vcmp.eq.f32.partialorder %v1185, 8.507059e+37
        %v1187 = vand.u32 %v1158, 2147483648
        %v1188 = vor.u32 1.1754944e-38, %v1187
        %v1189 = vsel %vm1186, %v1188, %v1184
        %v1190 = vmul.f32 1.0, %v1189
        %v1191 = vrcp.pop %v1159
        %v1192 = vmul.f32 %v1159, %v1191
        %v1193 = vsub.f32 1.0, %v1192
        %v1194 = vmul.f32 %v1191, %v1193
        %v1195 = vadd.f32 %v1191, %v1194
        %vm1196 = vweird.f32 %v1159
        %vm1197 = vweird.f32 %v1191
        %vm1198 = vmor %vm1196, %vm1197
        %v1199 = vsel %vm1198, %v1191, %v1195
        %v1200 = vand.u32 2147483647, %v1159
        %vm1201 = vcmp.eq.f32.partialorder %v1200, 8.507059e+37
        %v1202 = vand.u32 %v1159, 2147483648
        %v1203 = vor.u32 1.1754944e-38, %v1202
        %v1204 = vsel %vm1201, %v1203, %v1199
        %v1205 = vmul.f32 1.0, %v1204
        %v1206 = vrcp.pop %v1160
        %v1207 = vmul.f32 %v1160, %v1206
        %v1208 = vsub.f32 1.0, %v1207
        %v1209 = vmul.f32 %v1206, %v1208
        %v1210 = vadd.f32 %v1206, %v1209
        %vm1211 = vweird.f32 %v1160
        %vm1212 = vweird.f32 %v1206
        %vm1213 = vmor %vm1211, %vm1212
        %v1214 = vsel %vm1213, %v1206, %v1210
        %v1215 = vand.u32 2147483647, %v1160
        %vm1216 = vcmp.eq.f32.partialorder %v1215, 8.507059e+37
        %v1217 = vand.u32 %v1160, 2147483648
        %v1218 = vor.u32 1.1754944e-38, %v1217
        %v1219 = vsel %vm1216, %v1218, %v1214
        %v1220 = vmul.f32 1.0, %v1219
        %v1221 = vtanh.pop %v1137
        %v1222 = vtanh.pop %v1138
        %v1223 = vtanh.pop %v1139
        %v1224 = vtanh.pop %v1140
        %v1225 = vmul.f32 %v1175, %v1221
        %v1226 = vmul.f32 %v1190, %v1222
        %v1227 = vmul.f32 %v1205, %v1223
        %v1228 = vmul.f32 %v1220, %v1224
        %s1229 = scalar_lea.vmem %s7, 8
        %v1230 = vld [vmem:[%s1229] sm:$0xf]
        %v1231 = vld [vmem:[%s1229 + $0x4] sm:$0xf]
        %v1232 = vunpack.c.l.bf16 %v1230
        %v1233 = vunpack.c.l.bf16 %v1231
        %v1235 = vsel %vm666, %v1232, 0
        %v1238 = vsel %vm666, %v1233, 0
        %1240 = vmatpush.msra.mxu0 0.0
        %1241 = vmatpush.msra.mxu0 0.0
        %1242 = vmatpush.msra.mxu0 0.0
        %1243 = vmatpush.msra.mxu0 0.0
        %1244 = vmatpush.msra.mxu0 0.0
        %1245 = vmatpush.msra.mxu0 0.0
        %1246 = vmatpush.msra.mxu0 0.0
        %1247 = vmatpush.msra.mxu0 0.0
        %1248 = vmatpush.msra.mxu0 0.0
        %1249 = vmatpush.msra.mxu0 0.0
        %1250 = vmatpush.msra.mxu0 0.0
        %1251 = vmatpush.msra.mxu0 0.0
        %1252 = vmatpush.msra.mxu0 0.0
        %1253 = vmatpush.msra.mxu0 0.0
        %1254 = vmatpush.msra.mxu0 %v1227
        %1255 = vmatpush.msra.mxu0 %v1225
        %1256 = vmatmul.f32.gmra.mxu0 %v1235
        %v1257 = vpop.f32.mrf.mxu0
        %v1258 = vadd.f32 0.0, %v1257
        %1259 = vmatmul.f32.gmra.mxu0 %v1238
        %v1260 = vpop.f32.mrf.mxu0
        %v1261 = vadd.f32 0.0, %v1260
        %1262 = vdwg.mxu0
        %1263 = vmatpush.msra.mxu0 0.0
        %1264 = vmatpush.msra.mxu0 0.0
        %1265 = vmatpush.msra.mxu0 0.0
        %1266 = vmatpush.msra.mxu0 0.0
        %1267 = vmatpush.msra.mxu0 0.0
        %1268 = vmatpush.msra.mxu0 0.0
        %1269 = vmatpush.msra.mxu0 0.0
        %1270 = vmatpush.msra.mxu0 0.0
        %1271 = vmatpush.msra.mxu0 0.0
        %1272 = vmatpush.msra.mxu0 0.0
        %1273 = vmatpush.msra.mxu0 0.0
        %1274 = vmatpush.msra.mxu0 0.0
        %1275 = vmatpush.msra.mxu0 0.0
        %1276 = vmatpush.msra.mxu0 0.0
        %1277 = vmatpush.msra.mxu0 %v1228
        %1278 = vmatpush.msra.mxu0 %v1226
        %1279 = vmatmul.f32.gmra.mxu0 %v1235
        %v1280 = vpop.f32.mrf.mxu0
        %v1281 = vadd.f32 0.0, %v1280
        %1282 = vmatmul.f32.gmra.mxu0 %v1238
        %v1283 = vpop.f32.mrf.mxu0
        %v1284 = vadd.f32 0.0, %v1283
        %1285 = vdwg.mxu0
        %v1287 = vsel %vm666, %v925, 0
        %v1290 = vsel %vm666, %v926, 0
        %1292 = vmatpush.msra.mxu0 0.0
        %1293 = vmatpush.msra.mxu0 0.0
        %1294 = vmatpush.msra.mxu0 0.0
        %1295 = vmatpush.msra.mxu0 0.0
        %1296 = vmatpush.msra.mxu0 0.0
        %1297 = vmatpush.msra.mxu0 0.0
        %1298 = vmatpush.msra.mxu0 0.0
        %1299 = vmatpush.msra.mxu0 0.0
        %1300 = vmatpush.msra.mxu0 0.0
        %1301 = vmatpush.msra.mxu0 0.0
        %1302 = vmatpush.msra.mxu0 0.0
        %1303 = vmatpush.msra.mxu0 0.0
        %1304 = vmatpush.msra.mxu0 0.0
        %1305 = vmatpush.msra.mxu0 0.0
        %1306 = vmatpush.msra.mxu0 %v921
        %1307 = vmatpush.msra.mxu0 %v919
        %1308 = vmatmul.f32.gmra.mxu0 %v1287
        %v1309 = vpop.f32.mrf.mxu0
        %v1310 = vadd.f32 %v1258, %v1309
        %1311 = vmatmul.f32.gmra.mxu0 %v1290
        %v1312 = vpop.f32.mrf.mxu0
        %v1313 = vadd.f32 %v1261, %v1312
        %1314 = vdwg.mxu0
        %1315 = vmatpush.msra.mxu0 0.0
        %1316 = vmatpush.msra.mxu0 0.0
        %1317 = vmatpush.msra.mxu0 0.0
        %1318 = vmatpush.msra.mxu0 0.0
        %1319 = vmatpush.msra.mxu0 0.0
        %1320 = vmatpush.msra.mxu0 0.0
        %1321 = vmatpush.msra.mxu0 0.0
        %1322 = vmatpush.msra.mxu0 0.0
        %1323 = vmatpush.msra.mxu0 0.0
        %1324 = vmatpush.msra.mxu0 0.0
        %1325 = vmatpush.msra.mxu0 0.0
        %1326 = vmatpush.msra.mxu0 0.0
        %1327 = vmatpush.msra.mxu0 0.0
        %1328 = vmatpush.msra.mxu0 0.0
        %1329 = vmatpush.msra.mxu0 %v922
        %1330 = vmatpush.msra.mxu0 %v920
        %1331 = vmatmul.f32.gmra.mxu0 %v1287
        %v1332 = vpop.f32.mrf.mxu0
        %v1333 = vadd.f32 %v1281, %v1332
        %1334 = vmatmul.f32.gmra.mxu0 %v1290
        %v1335 = vpop.f32.mrf.mxu0
        %v1336 = vadd.f32 %v1284, %v1335
        %1337 = vdwg.mxu0
        %v1338 = vadd.f32 %v927, %v1225
        %v1339 = vadd.f32 %v928, %v1226
        %v1340 = vadd.f32 %v929, %v1227
        %v1341 = vadd.f32 %v930, %v1228
        %vm1342 = vcmp.ge.s32.totalorder %v468, 4
        %vm1343 = vcmp.ge.s32.totalorder %v469, 4
        %1344 = vrot.lane.b32.xlu0 %v1338, 4
        %v1345 = vpop.permute.xlu0 %1344
        %1346 = vrot.lane.b32.xlu0 %v1340, 4
        %v1347 = vpop.permute.xlu0 %1346
        %1348 = vrot.lane.b32.xlu0 %v1339, 4
        %v1349 = vpop.permute.xlu0 %1348
        %1350 = vrot.lane.b32.xlu0 %v1341, 4
        %v1351 = vpop.permute.xlu0 %1350
        %vm1352 = vcmp.lt.s32.totalorder %v444, 4
        %v1353 = vsel %vm1352, %v1345, %v1349
        %v1354 = vsel %vm1352, %v1347, %v1351
        %v1355 = vsel %vm1352, %v1349, %v1345
        %v1356 = vsel %vm1352, %v1351, %v1347
        %v1357 = vsel %vm1342, 1, 0
        %v1358 = vsel %vm1343, 1, 0
        %vm1359 = vcmp.eq.s32.totalorder %v1357, 1
        %vm1360 = vcmp.eq.s32.totalorder %v1358, 1
        %v1361 = vsel %vm1359, %v1355, 0.0
        %v1362 = vsel %vm1360, %v1353, 0.0
        %v1363 = vsel %vm1359, %v1356, 0.0
        %v1364 = vsel %vm1360, %v1354, 0.0
        %s1365 = scalar_lea.vmem %s4, 32
        %v1366 = vld [vmem:[%s1365] sm:$0xf]
        %v1367 = vld [vmem:[%s1365 + $0x4] sm:$0xf]
        %v1368 = vld [vmem:[%s1365 + $0x8] sm:$0xf]
        %v1369 = vld [vmem:[%s1365 + $0xc] sm:$0xf]
        %v1370 = vunpack.c.l.bf16 %v1366
        %v1371 = vunpack.c.l.bf16 %v1367
        %v1372 = vunpack.c.l.bf16 %v1368
        %v1373 = vunpack.c.l.bf16 %v1369
        %s1374 = scalar_lea.vmem %s5, 32
        %v1375 = vld [vmem:[%s1374] sm:$0xf]
        %v1376 = vld [vmem:[%s1374 + $0x4] sm:$0xf]
        %v1377 = vld [vmem:[%s1374 + $0x8] sm:$0xf]
        %v1378 = vld [vmem:[%s1374 + $0xc] sm:$0xf]
        %v1379 = vunpack.c.l.bf16 %v1375
        %v1380 = vunpack.c.l.bf16 %v1376
        %v1381 = vunpack.c.l.bf16 %v1377
        %v1382 = vunpack.c.l.bf16 %v1378
        %v1384 = vsel %vm666, %v1379, 0
        %v1387 = vsel %vm666, %v1380, 0
        %v1390 = vsel %vm666, %v1381, 0
        %v1393 = vsel %vm666, %v1382, 0
        %1395 = vmatpush.msra.mxu0 0.0
        %1396 = vmatpush.msra.mxu0 0.0
        %1397 = vmatpush.msra.mxu0 0.0
        %1398 = vmatpush.msra.mxu0 0.0
        %1399 = vmatpush.msra.mxu0 0.0
        %1400 = vmatpush.msra.mxu0 0.0
        %1401 = vmatpush.msra.mxu0 0.0
        %1402 = vmatpush.msra.mxu0 0.0
        %1403 = vmatpush.msra.mxu0 0.0
        %1404 = vmatpush.msra.mxu0 0.0
        %1405 = vmatpush.msra.mxu0 0.0
        %1406 = vmatpush.msra.mxu0 0.0
        %1407 = vmatpush.msra.mxu0 0.0
        %1408 = vmatpush.msra.mxu0 0.0
        %1409 = vmatpush.msra.mxu0 %v1340
        %1410 = vmatpush.msra.mxu0 %v1338
        %1411 = vmatmul.f32.gmra.mxu0 %v1384
        %v1412 = vpop.f32.mrf.mxu0
        %v1413 = vadd.f32 0.0, %v1412
        %1414 = vmatmul.f32.gmra.mxu0 %v1387
        %v1415 = vpop.f32.mrf.mxu0
        %v1416 = vadd.f32 0.0, %v1415
        %1417 = vmatmul.f32.gmra.mxu0 %v1390
        %v1418 = vpop.f32.mrf.mxu0
        %v1419 = vadd.f32 0.0, %v1418
        %1420 = vmatmul.f32.gmra.mxu0 %v1393
        %v1421 = vpop.f32.mrf.mxu0
        %v1422 = vadd.f32 0.0, %v1421
        %1423 = vdwg.mxu0
        %1424 = vmatpush.msra.mxu0 0.0
        %1425 = vmatpush.msra.mxu0 0.0
        %1426 = vmatpush.msra.mxu0 0.0
        %1427 = vmatpush.msra.mxu0 0.0
        %1428 = vmatpush.msra.mxu0 0.0
        %1429 = vmatpush.msra.mxu0 0.0
        %1430 = vmatpush.msra.mxu0 0.0
        %1431 = vmatpush.msra.mxu0 0.0
        %1432 = vmatpush.msra.mxu0 0.0
        %1433 = vmatpush.msra.mxu0 0.0
        %1434 = vmatpush.msra.mxu0 0.0
        %1435 = vmatpush.msra.mxu0 0.0
        %1436 = vmatpush.msra.mxu0 0.0
        %1437 = vmatpush.msra.mxu0 0.0
        %1438 = vmatpush.msra.mxu0 %v1341
        %1439 = vmatpush.msra.mxu0 %v1339
        %1440 = vmatmul.f32.gmra.mxu0 %v1384
        %v1441 = vpop.f32.mrf.mxu0
        %v1442 = vadd.f32 0.0, %v1441
        %1443 = vmatmul.f32.gmra.mxu0 %v1387
        %v1444 = vpop.f32.mrf.mxu0
        %v1445 = vadd.f32 0.0, %v1444
        %1446 = vmatmul.f32.gmra.mxu0 %v1390
        %v1447 = vpop.f32.mrf.mxu0
        %v1448 = vadd.f32 0.0, %v1447
        %1449 = vmatmul.f32.gmra.mxu0 %v1393
        %v1450 = vpop.f32.mrf.mxu0
        %v1451 = vadd.f32 0.0, %v1450
        %1452 = vdwg.mxu0
        %v1454 = vsel %vm666, %v1370, 0
        %v1457 = vsel %vm666, %v1371, 0
        %v1460 = vsel %vm666, %v1372, 0
        %v1463 = vsel %vm666, %v1373, 0
        %1465 = vmatpush.msra.mxu0 0.0
        %1466 = vmatpush.msra.mxu0 0.0
        %1467 = vmatpush.msra.mxu0 0.0
        %1468 = vmatpush.msra.mxu0 0.0
        %1469 = vmatpush.msra.mxu0 0.0
        %1470 = vmatpush.msra.mxu0 0.0
        %1471 = vmatpush.msra.mxu0 0.0
        %1472 = vmatpush.msra.mxu0 0.0
        %1473 = vmatpush.msra.mxu0 0.0
        %1474 = vmatpush.msra.mxu0 0.0
        %1475 = vmatpush.msra.mxu0 0.0
        %1476 = vmatpush.msra.mxu0 0.0
        %1477 = vmatpush.msra.mxu0 0.0
        %1478 = vmatpush.msra.mxu0 0.0
        %1479 = vmatpush.msra.mxu0 %v1363
        %1480 = vmatpush.msra.mxu0 %v1361
        %1481 = vmatmul.f32.gmra.mxu0 %v1454
        %v1482 = vpop.f32.mrf.mxu0
        %v1483 = vadd.f32 %v1413, %v1482
        %1484 = vmatmul.f32.gmra.mxu0 %v1457
        %v1485 = vpop.f32.mrf.mxu0
        %v1486 = vadd.f32 %v1416, %v1485
        %1487 = vmatmul.f32.gmra.mxu0 %v1460
        %v1488 = vpop.f32.mrf.mxu0
        %v1489 = vadd.f32 %v1419, %v1488
        %1490 = vmatmul.f32.gmra.mxu0 %v1463
        %v1491 = vpop.f32.mrf.mxu0
        %v1492 = vadd.f32 %v1422, %v1491
        %1493 = vdwg.mxu0
        %1494 = vmatpush.msra.mxu0 0.0
        %1495 = vmatpush.msra.mxu0 0.0
        %1496 = vmatpush.msra.mxu0 0.0
        %1497 = vmatpush.msra.mxu0 0.0
        %1498 = vmatpush.msra.mxu0 0.0
        %1499 = vmatpush.msra.mxu0 0.0
        %1500 = vmatpush.msra.mxu0 0.0
        %1501 = vmatpush.msra.mxu0 0.0
        %1502 = vmatpush.msra.mxu0 0.0
        %1503 = vmatpush.msra.mxu0 0.0
        %1504 = vmatpush.msra.mxu0 0.0
        %1505 = vmatpush.msra.mxu0 0.0
        %1506 = vmatpush.msra.mxu0 0.0
        %1507 = vmatpush.msra.mxu0 0.0
        %1508 = vmatpush.msra.mxu0 %v1364
        %1509 = vmatpush.msra.mxu0 %v1362
        %1510 = vmatmul.f32.gmra.mxu0 %v1454
        %v1511 = vpop.f32.mrf.mxu0
        %v1512 = vadd.f32 %v1442, %v1511
        %1513 = vmatmul.f32.gmra.mxu0 %v1457
        %v1514 = vpop.f32.mrf.mxu0
        %v1515 = vadd.f32 %v1445, %v1514
        %1516 = vmatmul.f32.gmra.mxu0 %v1460
        %v1517 = vpop.f32.mrf.mxu0
        %v1518 = vadd.f32 %v1448, %v1517
        %1519 = vmatmul.f32.gmra.mxu0 %v1463
        %v1520 = vpop.f32.mrf.mxu0
        %v1521 = vadd.f32 %v1451, %v1520
        %1522 = vdwg.mxu0
        %s1523 = scalar_lea.vmem %s6, 64
        %v1524 = vld [vmem:[%s1523] sm:$0xff]
        %v1525 = vld [vmem:[%s1523 + $0x8] sm:$0xff]
        %v1526 = vld [vmem:[%s1523 + $0x10] sm:$0xff]
        %v1527 = vld [vmem:[%s1523 + $0x18] sm:$0xff]
        %1529 = vset.pattern.permute.xlu0 0
        %1530 = vperm.xlu0 %1529, %v1524
        %v1531 = vpop.permute.xlu0 %1530
        %1534 = vset.pattern.permute.xlu0 0
        %1535 = vperm.xlu0 %1534, %v1525
        %v1536 = vpop.permute.xlu0 %1535
        %1539 = vset.pattern.permute.xlu0 0
        %1540 = vperm.xlu0 %1539, %v1526
        %v1541 = vpop.permute.xlu0 %1540
        %1544 = vset.pattern.permute.xlu0 0
        %1545 = vperm.xlu0 %1544, %v1527
        %v1546 = vpop.permute.xlu0 %1545
        %v1548 = vadd.f32 %v1483, %v1531
        %v1549 = vadd.f32 %v1512, %v1531
        %v1550 = vadd.f32 %v1486, %v1536
        %v1551 = vadd.f32 %v1515, %v1536
        %v1552 = vadd.f32 %v1489, %v1541
        %v1553 = vadd.f32 %v1518, %v1541
        %v1554 = vadd.f32 %v1492, %v1546
        %v1555 = vadd.f32 %v1521, %v1546
        %v1556 = vxor.u32 %v1552, 2147483648
        %v1557 = vxor.u32 %v1553, 2147483648
        %v1558 = vxor.u32 %v1554, 2147483648
        %v1559 = vxor.u32 %v1555, 2147483648
        %v1560 = vmul.f32 %v1556, 1.442695
        %v1561 = vpow.pop %v1560
        %v1562 = vmul.f32 %v1557, 1.442695
        %v1563 = vpow.pop %v1562
        %v1564 = vmul.f32 %v1558, 1.442695
        %v1565 = vpow.pop %v1564
        %v1566 = vmul.f32 %v1559, 1.442695
        %v1567 = vpow.pop %v1566
        %v1568 = vadd.f32 %v1561, 1.0
        %v1569 = vadd.f32 %v1563, 1.0
        %v1570 = vadd.f32 %v1565, 1.0
        %v1571 = vadd.f32 %v1567, 1.0
        %v1572 = vrcp.pop %v1568
        %v1573 = vmul.f32 %v1568, %v1572
        %v1574 = vsub.f32 1.0, %v1573
        %v1575 = vmul.f32 %v1572, %v1574
        %v1576 = vadd.f32 %v1572, %v1575
        %vm1577 = vweird.f32 %v1568
        %vm1578 = vweird.f32 %v1572
        %vm1579 = vmor %vm1577, %vm1578
        %v1580 = vsel %vm1579, %v1572, %v1576
        %v1581 = vand.u32 2147483647, %v1568
        %vm1582 = vcmp.eq.f32.partialorder %v1581, 8.507059e+37
        %v1583 = vand.u32 %v1568, 2147483648
        %v1584 = vor.u32 1.1754944e-38, %v1583
        %v1585 = vsel %vm1582, %v1584, %v1580
        %v1586 = vmul.f32 1.0, %v1585
        %v1587 = vrcp.pop %v1569
        %v1588 = vmul.f32 %v1569, %v1587
        %v1589 = vsub.f32 1.0, %v1588
        %v1590 = vmul.f32 %v1587, %v1589
        %v1591 = vadd.f32 %v1587, %v1590
        %vm1592 = vweird.f32 %v1569
        %vm1593 = vweird.f32 %v1587
        %vm1594 = vmor %vm1592, %vm1593
        %v1595 = vsel %vm1594, %v1587, %v1591
        %v1596 = vand.u32 2147483647, %v1569
        %vm1597 = vcmp.eq.f32.partialorder %v1596, 8.507059e+37
        %v1598 = vand.u32 %v1569, 2147483648
        %v1599 = vor.u32 1.1754944e-38, %v1598
        %v1600 = vsel %vm1597, %v1599, %v1595
        %v1601 = vmul.f32 1.0, %v1600
        %v1602 = vrcp.pop %v1570
        %v1603 = vmul.f32 %v1570, %v1602
        %v1604 = vsub.f32 1.0, %v1603
        %v1605 = vmul.f32 %v1602, %v1604
        %v1606 = vadd.f32 %v1602, %v1605
        %vm1607 = vweird.f32 %v1570
        %vm1608 = vweird.f32 %v1602
        %vm1609 = vmor %vm1607, %vm1608
        %v1610 = vsel %vm1609, %v1602, %v1606
        %v1611 = vand.u32 2147483647, %v1570
        %vm1612 = vcmp.eq.f32.partialorder %v1611, 8.507059e+37
        %v1613 = vand.u32 %v1570, 2147483648
        %v1614 = vor.u32 1.1754944e-38, %v1613
        %v1615 = vsel %vm1612, %v1614, %v1610
        %v1616 = vmul.f32 1.0, %v1615
        %v1617 = vrcp.pop %v1571
        %v1618 = vmul.f32 %v1571, %v1617
        %v1619 = vsub.f32 1.0, %v1618
        %v1620 = vmul.f32 %v1617, %v1619
        %v1621 = vadd.f32 %v1617, %v1620
        %vm1622 = vweird.f32 %v1571
        %vm1623 = vweird.f32 %v1617
        %vm1624 = vmor %vm1622, %vm1623
        %v1625 = vsel %vm1624, %v1617, %v1621
        %v1626 = vand.u32 2147483647, %v1571
        %vm1627 = vcmp.eq.f32.partialorder %v1626, 8.507059e+37
        %v1628 = vand.u32 %v1571, 2147483648
        %v1629 = vor.u32 1.1754944e-38, %v1628
        %v1630 = vsel %vm1627, %v1629, %v1625
        %v1631 = vmul.f32 1.0, %v1630
        %v1632 = vtanh.pop %v1548
        %v1633 = vtanh.pop %v1549
        %v1634 = vtanh.pop %v1550
        %v1635 = vtanh.pop %v1551
        %v1636 = vmul.f32 %v1586, %v1632
        %v1637 = vmul.f32 %v1601, %v1633
        %v1638 = vmul.f32 %v1616, %v1634
        %v1639 = vmul.f32 %v1631, %v1635
        %s1640 = scalar_lea.vmem %s7, 16
        %v1641 = vld [vmem:[%s1640] sm:$0xf]
        %v1642 = vld [vmem:[%s1640 + $0x4] sm:$0xf]
        %v1643 = vunpack.c.l.bf16 %v1641
        %v1644 = vunpack.c.l.bf16 %v1642
        %v1646 = vsel %vm666, %v1643, 0
        %v1649 = vsel %vm666, %v1644, 0
        %1651 = vmatpush.msra.mxu0 0.0
        %1652 = vmatpush.msra.mxu0 0.0
        %1653 = vmatpush.msra.mxu0 0.0
        %1654 = vmatpush.msra.mxu0 0.0
        %1655 = vmatpush.msra.mxu0 0.0
        %1656 = vmatpush.msra.mxu0 0.0
        %1657 = vmatpush.msra.mxu0 0.0
        %1658 = vmatpush.msra.mxu0 0.0
        %1659 = vmatpush.msra.mxu0 0.0
        %1660 = vmatpush.msra.mxu0 0.0
        %1661 = vmatpush.msra.mxu0 0.0
        %1662 = vmatpush.msra.mxu0 0.0
        %1663 = vmatpush.msra.mxu0 0.0
        %1664 = vmatpush.msra.mxu0 0.0
        %1665 = vmatpush.msra.mxu0 %v1638
        %1666 = vmatpush.msra.mxu0 %v1636
        %1667 = vmatmul.f32.gmra.mxu0 %v1646
        %v1668 = vpop.f32.mrf.mxu0
        %v1669 = vadd.f32 0.0, %v1668
        %1670 = vmatmul.f32.gmra.mxu0 %v1649
        %v1671 = vpop.f32.mrf.mxu0
        %v1672 = vadd.f32 0.0, %v1671
        %1673 = vdwg.mxu0
        %1674 = vmatpush.msra.mxu0 0.0
        %1675 = vmatpush.msra.mxu0 0.0
        %1676 = vmatpush.msra.mxu0 0.0
        %1677 = vmatpush.msra.mxu0 0.0
        %1678 = vmatpush.msra.mxu0 0.0
        %1679 = vmatpush.msra.mxu0 0.0
        %1680 = vmatpush.msra.mxu0 0.0
        %1681 = vmatpush.msra.mxu0 0.0
        %1682 = vmatpush.msra.mxu0 0.0
        %1683 = vmatpush.msra.mxu0 0.0
        %1684 = vmatpush.msra.mxu0 0.0
        %1685 = vmatpush.msra.mxu0 0.0
        %1686 = vmatpush.msra.mxu0 0.0
        %1687 = vmatpush.msra.mxu0 0.0
        %1688 = vmatpush.msra.mxu0 %v1639
        %1689 = vmatpush.msra.mxu0 %v1637
        %1690 = vmatmul.f32.gmra.mxu0 %v1646
        %v1691 = vpop.f32.mrf.mxu0
        %v1692 = vadd.f32 0.0, %v1691
        %1693 = vmatmul.f32.gmra.mxu0 %v1649
        %v1694 = vpop.f32.mrf.mxu0
        %v1695 = vadd.f32 0.0, %v1694
        %1696 = vdwg.mxu0
        %v1697 = vadd.f32 %v1310, %v1669
        %v1698 = vadd.f32 %v1333, %v1692
        %v1699 = vadd.f32 %v1313, %v1672
        %v1700 = vadd.f32 %v1336, %v1695
        %v1701 = vadd.f32 %v1338, %v1636
        %v1702 = vadd.f32 %v1339, %v1637
        %v1703 = vadd.f32 %v1340, %v1638
        %v1704 = vadd.f32 %v1341, %v1639
        %vm1705 = vcmp.ge.s32.totalorder %v468, 8
        %vm1706 = vcmp.ge.s32.totalorder %v469, 8
        %1707 = vrot.lane.b32.xlu0 %v1701, 8
        %v1708 = vpop.permute.xlu0 %1707
        %1709 = vrot.lane.b32.xlu0 %v1703, 8
        %v1710 = vpop.permute.xlu0 %1709
        %1711 = vrot.lane.b32.xlu0 %v1702, 8
        %v1712 = vpop.permute.xlu0 %1711
        %1713 = vrot.lane.b32.xlu0 %v1704, 8
        %v1714 = vpop.permute.xlu0 %1713
        %vm1715 = vcmp.lt.s32.totalorder %v444, 8
        %v1716 = vsel %vm1715, %v1708, %v1712
        %v1717 = vsel %vm1715, %v1710, %v1714
        %v1718 = vsel %vm1715, %v1712, %v1708
        %v1719 = vsel %vm1715, %v1714, %v1710
        %v1720 = vsel %vm1705, 1, 0
        %v1721 = vsel %vm1706, 1, 0
        %vm1722 = vcmp.eq.s32.totalorder %v1720, 1
        %vm1723 = vcmp.eq.s32.totalorder %v1721, 1
        %v1724 = vsel %vm1722, %v1718, 0.0
        %v1725 = vsel %vm1723, %v1716, 0.0
        %v1726 = vsel %vm1722, %v1719, 0.0
        %v1727 = vsel %vm1723, %v1717, 0.0
        %s1728 = scalar_lea.vmem %s4, 48
        %v1729 = vld [vmem:[%s1728] sm:$0xf]
        %v1730 = vld [vmem:[%s1728 + $0x4] sm:$0xf]
        %v1731 = vld [vmem:[%s1728 + $0x8] sm:$0xf]
        %v1732 = vld [vmem:[%s1728 + $0xc] sm:$0xf]
        %v1733 = vunpack.c.l.bf16 %v1729
        %v1734 = vunpack.c.l.bf16 %v1730
        %v1735 = vunpack.c.l.bf16 %v1731
        %v1736 = vunpack.c.l.bf16 %v1732
        %s1737 = scalar_lea.vmem %s5, 48
        %v1738 = vld [vmem:[%s1737] sm:$0xf]
        %v1739 = vld [vmem:[%s1737 + $0x4] sm:$0xf]
        %v1740 = vld [vmem:[%s1737 + $0x8] sm:$0xf]
        %v1741 = vld [vmem:[%s1737 + $0xc] sm:$0xf]
        %v1742 = vunpack.c.l.bf16 %v1738
        %v1743 = vunpack.c.l.bf16 %v1739
        %v1744 = vunpack.c.l.bf16 %v1740
        %v1745 = vunpack.c.l.bf16 %v1741
        %v1747 = vsel %vm666, %v1742, 0
        %v1750 = vsel %vm666, %v1743, 0
        %v1753 = vsel %vm666, %v1744, 0
        %v1756 = vsel %vm666, %v1745, 0
        %1758 = vmatpush.msra.mxu0 0.0
        %1759 = vmatpush.msra.mxu0 0.0
        %1760 = vmatpush.msra.mxu0 0.0
        %1761 = vmatpush.msra.mxu0 0.0
        %1762 = vmatpush.msra.mxu0 0.0
        %1763 = vmatpush.msra.mxu0 0.0
        %1764 = vmatpush.msra.mxu0 0.0
        %1765 = vmatpush.msra.mxu0 0.0
        %1766 = vmatpush.msra.mxu0 0.0
        %1767 = vmatpush.msra.mxu0 0.0
        %1768 = vmatpush.msra.mxu0 0.0
        %1769 = vmatpush.msra.mxu0 0.0
        %1770 = vmatpush.msra.mxu0 0.0
        %1771 = vmatpush.msra.mxu0 0.0
        %1772 = vmatpush.msra.mxu0 %v1703
        %1773 = vmatpush.msra.mxu0 %v1701
        %1774 = vmatmul.f32.gmra.mxu0 %v1747
        %v1775 = vpop.f32.mrf.mxu0
        %v1776 = vadd.f32 0.0, %v1775
        %1777 = vmatmul.f32.gmra.mxu0 %v1750
        %v1778 = vpop.f32.mrf.mxu0
        %v1779 = vadd.f32 0.0, %v1778
        %1780 = vmatmul.f32.gmra.mxu0 %v1753
        %v1781 = vpop.f32.mrf.mxu0
        %v1782 = vadd.f32 0.0, %v1781
        %1783 = vmatmul.f32.gmra.mxu0 %v1756
        %v1784 = vpop.f32.mrf.mxu0
        %v1785 = vadd.f32 0.0, %v1784
        %1786 = vdwg.mxu0
        %1787 = vmatpush.msra.mxu0 0.0
        %1788 = vmatpush.msra.mxu0 0.0
        %1789 = vmatpush.msra.mxu0 0.0
        %1790 = vmatpush.msra.mxu0 0.0
        %1791 = vmatpush.msra.mxu0 0.0
        %1792 = vmatpush.msra.mxu0 0.0
        %1793 = vmatpush.msra.mxu0 0.0
        %1794 = vmatpush.msra.mxu0 0.0
        %1795 = vmatpush.msra.mxu0 0.0
        %1796 = vmatpush.msra.mxu0 0.0
        %1797 = vmatpush.msra.mxu0 0.0
        %1798 = vmatpush.msra.mxu0 0.0
        %1799 = vmatpush.msra.mxu0 0.0
        %1800 = vmatpush.msra.mxu0 0.0
        %1801 = vmatpush.msra.mxu0 %v1704
        %1802 = vmatpush.msra.mxu0 %v1702
        %1803 = vmatmul.f32.gmra.mxu0 %v1747
        %v1804 = vpop.f32.mrf.mxu0
        %v1805 = vadd.f32 0.0, %v1804
        %1806 = vmatmul.f32.gmra.mxu0 %v1750
        %v1807 = vpop.f32.mrf.mxu0
        %v1808 = vadd.f32 0.0, %v1807
        %1809 = vmatmul.f32.gmra.mxu0 %v1753
        %v1810 = vpop.f32.mrf.mxu0
        %v1811 = vadd.f32 0.0, %v1810
        %1812 = vmatmul.f32.gmra.mxu0 %v1756
        %v1813 = vpop.f32.mrf.mxu0
        %v1814 = vadd.f32 0.0, %v1813
        %1815 = vdwg.mxu0
        %v1817 = vsel %vm666, %v1733, 0
        %v1820 = vsel %vm666, %v1734, 0
        %v1823 = vsel %vm666, %v1735, 0
        %v1826 = vsel %vm666, %v1736, 0
        %1828 = vmatpush.msra.mxu0 0.0
        %1829 = vmatpush.msra.mxu0 0.0
        %1830 = vmatpush.msra.mxu0 0.0
        %1831 = vmatpush.msra.mxu0 0.0
        %1832 = vmatpush.msra.mxu0 0.0
        %1833 = vmatpush.msra.mxu0 0.0
        %1834 = vmatpush.msra.mxu0 0.0
        %1835 = vmatpush.msra.mxu0 0.0
        %1836 = vmatpush.msra.mxu0 0.0
        %1837 = vmatpush.msra.mxu0 0.0
        %1838 = vmatpush.msra.mxu0 0.0
        %1839 = vmatpush.msra.mxu0 0.0
        %1840 = vmatpush.msra.mxu0 0.0
        %1841 = vmatpush.msra.mxu0 0.0
        %1842 = vmatpush.msra.mxu0 %v1726
        %1843 = vmatpush.msra.mxu0 %v1724
        %1844 = vmatmul.f32.gmra.mxu0 %v1817
        %v1845 = vpop.f32.mrf.mxu0
        %v1846 = vadd.f32 %v1776, %v1845
        %1847 = vmatmul.f32.gmra.mxu0 %v1820
        %v1848 = vpop.f32.mrf.mxu0
        %v1849 = vadd.f32 %v1779, %v1848
        %1850 = vmatmul.f32.gmra.mxu0 %v1823
        %v1851 = vpop.f32.mrf.mxu0
        %v1852 = vadd.f32 %v1782, %v1851
        %1853 = vmatmul.f32.gmra.mxu0 %v1826
        %v1854 = vpop.f32.mrf.mxu0
        %v1855 = vadd.f32 %v1785, %v1854
        %1856 = vdwg.mxu0
        %1857 = vmatpush.msra.mxu0 0.0
        %1858 = vmatpush.msra.mxu0 0.0
        %1859 = vmatpush.msra.mxu0 0.0
        %1860 = vmatpush.msra.mxu0 0.0
        %1861 = vmatpush.msra.mxu0 0.0
        %1862 = vmatpush.msra.mxu0 0.0
        %1863 = vmatpush.msra.mxu0 0.0
        %1864 = vmatpush.msra.mxu0 0.0
        %1865 = vmatpush.msra.mxu0 0.0
        %1866 = vmatpush.msra.mxu0 0.0
        %1867 = vmatpush.msra.mxu0 0.0
        %1868 = vmatpush.msra.mxu0 0.0
        %1869 = vmatpush.msra.mxu0 0.0
        %1870 = vmatpush.msra.mxu0 0.0
        %1871 = vmatpush.msra.mxu0 %v1727
        %1872 = vmatpush.msra.mxu0 %v1725
        %1873 = vmatmul.f32.gmra.mxu0 %v1817
        %v1874 = vpop.f32.mrf.mxu0
        %v1875 = vadd.f32 %v1805, %v1874
        %1876 = vmatmul.f32.gmra.mxu0 %v1820
        %v1877 = vpop.f32.mrf.mxu0
        %v1878 = vadd.f32 %v1808, %v1877
        %1879 = vmatmul.f32.gmra.mxu0 %v1823
        %v1880 = vpop.f32.mrf.mxu0
        %v1881 = vadd.f32 %v1811, %v1880
        %1882 = vmatmul.f32.gmra.mxu0 %v1826
        %v1883 = vpop.f32.mrf.mxu0
        %v1884 = vadd.f32 %v1814, %v1883
        %1885 = vdwg.mxu0
        %s1886 = scalar_lea.vmem %s6, 96
        %v1887 = vld [vmem:[%s1886] sm:$0xff]
        %v1888 = vld [vmem:[%s1886 + $0x8] sm:$0xff]
        %v1889 = vld [vmem:[%s1886 + $0x10] sm:$0xff]
        %v1890 = vld [vmem:[%s1886 + $0x18] sm:$0xff]
        %1892 = vset.pattern.permute.xlu0 0
        %1893 = vperm.xlu0 %1892, %v1887
        %v1894 = vpop.permute.xlu0 %1893
        %1897 = vset.pattern.permute.xlu0 0
        %1898 = vperm.xlu0 %1897, %v1888
        %v1899 = vpop.permute.xlu0 %1898
        %1902 = vset.pattern.permute.xlu0 0
        %1903 = vperm.xlu0 %1902, %v1889
        %v1904 = vpop.permute.xlu0 %1903
        %1907 = vset.pattern.permute.xlu0 0
        %1908 = vperm.xlu0 %1907, %v1890
        %v1909 = vpop.permute.xlu0 %1908
        %v1911 = vadd.f32 %v1846, %v1894
        %v1912 = vadd.f32 %v1875, %v1894
        %v1913 = vadd.f32 %v1849, %v1899
        %v1914 = vadd.f32 %v1878, %v1899
        %v1915 = vadd.f32 %v1852, %v1904
        %v1916 = vadd.f32 %v1881, %v1904
        %v1917 = vadd.f32 %v1855, %v1909
        %v1918 = vadd.f32 %v1884, %v1909
        %v1919 = vxor.u32 %v1915, 2147483648
        %v1920 = vxor.u32 %v1916, 2147483648
        %v1921 = vxor.u32 %v1917, 2147483648
        %v1922 = vxor.u32 %v1918, 2147483648
        %v1923 = vmul.f32 %v1919, 1.442695
        %v1924 = vpow.pop %v1923
        %v1925 = vmul.f32 %v1920, 1.442695
        %v1926 = vpow.pop %v1925
        %v1927 = vmul.f32 %v1921, 1.442695
        %v1928 = vpow.pop %v1927
        %v1929 = vmul.f32 %v1922, 1.442695
        %v1930 = vpow.pop %v1929
        %v1931 = vadd.f32 %v1924, 1.0
        %v1932 = vadd.f32 %v1926, 1.0
        %v1933 = vadd.f32 %v1928, 1.0
        %v1934 = vadd.f32 %v1930, 1.0
        %v1935 = vrcp.pop %v1931
        %v1936 = vmul.f32 %v1931, %v1935
        %v1937 = vsub.f32 1.0, %v1936
        %v1938 = vmul.f32 %v1935, %v1937
        %v1939 = vadd.f32 %v1935, %v1938
        %vm1940 = vweird.f32 %v1931
        %vm1941 = vweird.f32 %v1935
        %vm1942 = vmor %vm1940, %vm1941
        %v1943 = vsel %vm1942, %v1935, %v1939
        %v1944 = vand.u32 2147483647, %v1931
        %vm1945 = vcmp.eq.f32.partialorder %v1944, 8.507059e+37
        %v1946 = vand.u32 %v1931, 2147483648
        %v1947 = vor.u32 1.1754944e-38, %v1946
        %v1948 = vsel %vm1945, %v1947, %v1943
        %v1949 = vmul.f32 1.0, %v1948
        %v1950 = vrcp.pop %v1932
        %v1951 = vmul.f32 %v1932, %v1950
        %v1952 = vsub.f32 1.0, %v1951
        %v1953 = vmul.f32 %v1950, %v1952
        %v1954 = vadd.f32 %v1950, %v1953
        %vm1955 = vweird.f32 %v1932
        %vm1956 = vweird.f32 %v1950
        %vm1957 = vmor %vm1955, %vm1956
        %v1958 = vsel %vm1957, %v1950, %v1954
        %v1959 = vand.u32 2147483647, %v1932
        %vm1960 = vcmp.eq.f32.partialorder %v1959, 8.507059e+37
        %v1961 = vand.u32 %v1932, 2147483648
        %v1962 = vor.u32 1.1754944e-38, %v1961
        %v1963 = vsel %vm1960, %v1962, %v1958
        %v1964 = vmul.f32 1.0, %v1963
        %v1965 = vrcp.pop %v1933
        %v1966 = vmul.f32 %v1933, %v1965
        %v1967 = vsub.f32 1.0, %v1966
        %v1968 = vmul.f32 %v1965, %v1967
        %v1969 = vadd.f32 %v1965, %v1968
        %vm1970 = vweird.f32 %v1933
        %vm1971 = vweird.f32 %v1965
        %vm1972 = vmor %vm1970, %vm1971
        %v1973 = vsel %vm1972, %v1965, %v1969
        %v1974 = vand.u32 2147483647, %v1933
        %vm1975 = vcmp.eq.f32.partialorder %v1974, 8.507059e+37
        %v1976 = vand.u32 %v1933, 2147483648
        %v1977 = vor.u32 1.1754944e-38, %v1976
        %v1978 = vsel %vm1975, %v1977, %v1973
        %v1979 = vmul.f32 1.0, %v1978
        %v1980 = vrcp.pop %v1934
        %v1981 = vmul.f32 %v1934, %v1980
        %v1982 = vsub.f32 1.0, %v1981
        %v1983 = vmul.f32 %v1980, %v1982
        %v1984 = vadd.f32 %v1980, %v1983
        %vm1985 = vweird.f32 %v1934
        %vm1986 = vweird.f32 %v1980
        %vm1987 = vmor %vm1985, %vm1986
        %v1988 = vsel %vm1987, %v1980, %v1984
        %v1989 = vand.u32 2147483647, %v1934
        %vm1990 = vcmp.eq.f32.partialorder %v1989, 8.507059e+37
        %v1991 = vand.u32 %v1934, 2147483648
        %v1992 = vor.u32 1.1754944e-38, %v1991
        %v1993 = vsel %vm1990, %v1992, %v1988
        %v1994 = vmul.f32 1.0, %v1993
        %v1995 = vtanh.pop %v1911
        %v1996 = vtanh.pop %v1912
        %v1997 = vtanh.pop %v1913
        %v1998 = vtanh.pop %v1914
        %v1999 = vmul.f32 %v1949, %v1995
        %v2000 = vmul.f32 %v1964, %v1996
        %v2001 = vmul.f32 %v1979, %v1997
        %v2002 = vmul.f32 %v1994, %v1998
        %s2003 = scalar_lea.vmem %s7, 24
        %v2004 = vld [vmem:[%s2003] sm:$0xf]
        %v2005 = vld [vmem:[%s2003 + $0x4] sm:$0xf]
        %v2006 = vunpack.c.l.bf16 %v2004
        %v2007 = vunpack.c.l.bf16 %v2005
        %v2009 = vsel %vm666, %v2006, 0
        %v2012 = vsel %vm666, %v2007, 0
        %2014 = vmatpush.msra.mxu0 0.0
        %2015 = vmatpush.msra.mxu0 0.0
        %2016 = vmatpush.msra.mxu0 0.0
        %2017 = vmatpush.msra.mxu0 0.0
        %2018 = vmatpush.msra.mxu0 0.0
        %2019 = vmatpush.msra.mxu0 0.0
        %2020 = vmatpush.msra.mxu0 0.0
        %2021 = vmatpush.msra.mxu0 0.0
        %2022 = vmatpush.msra.mxu0 0.0
        %2023 = vmatpush.msra.mxu0 0.0
        %2024 = vmatpush.msra.mxu0 0.0
        %2025 = vmatpush.msra.mxu0 0.0
        %2026 = vmatpush.msra.mxu0 0.0
        %2027 = vmatpush.msra.mxu0 0.0
        %2028 = vmatpush.msra.mxu0 %v2001
        %2029 = vmatpush.msra.mxu0 %v1999
        %2030 = vmatmul.f32.gmra.mxu0 %v2009
        %v2031 = vpop.f32.mrf.mxu0
        %v2032 = vadd.f32 0.0, %v2031
        %2033 = vmatmul.f32.gmra.mxu0 %v2012
        %v2034 = vpop.f32.mrf.mxu0
        %v2035 = vadd.f32 0.0, %v2034
        %2036 = vdwg.mxu0
        %2037 = vmatpush.msra.mxu0 0.0
        %2038 = vmatpush.msra.mxu0 0.0
        %2039 = vmatpush.msra.mxu0 0.0
        %2040 = vmatpush.msra.mxu0 0.0
        %2041 = vmatpush.msra.mxu0 0.0
        %2042 = vmatpush.msra.mxu0 0.0
        %2043 = vmatpush.msra.mxu0 0.0
        %2044 = vmatpush.msra.mxu0 0.0
        %2045 = vmatpush.msra.mxu0 0.0
        %2046 = vmatpush.msra.mxu0 0.0
        %2047 = vmatpush.msra.mxu0 0.0
        %2048 = vmatpush.msra.mxu0 0.0
        %2049 = vmatpush.msra.mxu0 0.0
        %2050 = vmatpush.msra.mxu0 0.0
        %2051 = vmatpush.msra.mxu0 %v2002
        %2052 = vmatpush.msra.mxu0 %v2000
        %2053 = vmatmul.f32.gmra.mxu0 %v2009
        %v2054 = vpop.f32.mrf.mxu0
        %v2055 = vadd.f32 0.0, %v2054
        %2056 = vmatmul.f32.gmra.mxu0 %v2012
        %v2057 = vpop.f32.mrf.mxu0
        %v2058 = vadd.f32 0.0, %v2057
        %2059 = vdwg.mxu0
        %v2060 = vadd.f32 %v1697, %v2032
        %v2061 = vadd.f32 %v1698, %v2055
        %v2062 = vadd.f32 %v1699, %v2035
        %v2063 = vadd.f32 %v1700, %v2058
        %v2064 = vld [vmem:[%s8] sm:$0xff]
        %v2065 = vld [vmem:[%s8 + $0x8] sm:$0xff]
        %2067 = vset.pattern.permute.xlu0 0
        %2068 = vperm.xlu0 %2067, %v2064
        %v2069 = vpop.permute.xlu0 %2068
        %2072 = vset.pattern.permute.xlu0 0
        %2073 = vperm.xlu0 %2072, %v2065
        %v2074 = vpop.permute.xlu0 %2073
        %v2076 = vadd.f32 %v2060, %v2069
        %v2077 = vadd.f32 %v2061, %v2069
        %v2078 = vadd.f32 %v2062, %v2074
        %v2079 = vadd.f32 %v2063, %v2074
        %v2080 = vmax.f32 %v2076, 0.0
        %v2081 = vmax.f32 %v2077, 0.0
        %v2082 = vmax.f32 %v2078, 0.0
        %v2083 = vmax.f32 %v2079, 0.0
        %v2084 = vld [vmem:[%s9] sm:$0xf]
        %v2085 = vld [vmem:[%s9 + $0x4] sm:$0xf]
        %v2086 = vunpack.c.l.bf16 %v2084
        %v2087 = vunpack.c.l.bf16 %v2085
        %v2088 = vld [vmem:[%s10] sm:$0xff]
        %v2089 = vld [vmem:[%s10 + $0x8] sm:$0xff]
        %2091 = vset.pattern.permute.xlu0 0
        %2092 = vperm.xlu0 %2091, %v2088
        %v2093 = vpop.permute.xlu0 %2092
        %2096 = vset.pattern.permute.xlu0 0
        %2097 = vperm.xlu0 %2096, %v2089
        %v2098 = vpop.permute.xlu0 %2097
        %v2101 = vsel %vm666, %v2086, 0
        %v2104 = vsel %vm666, %v2087, 0
        %2106 = vmatpush.msra.mxu0 0.0
        %2107 = vmatpush.msra.mxu0 0.0
        %2108 = vmatpush.msra.mxu0 0.0
        %2109 = vmatpush.msra.mxu0 0.0
        %2110 = vmatpush.msra.mxu0 0.0
        %2111 = vmatpush.msra.mxu0 0.0
        %2112 = vmatpush.msra.mxu0 0.0
        %2113 = vmatpush.msra.mxu0 0.0
        %2114 = vmatpush.msra.mxu0 0.0
        %2115 = vmatpush.msra.mxu0 0.0
        %2116 = vmatpush.msra.mxu0 0.0
        %2117 = vmatpush.msra.mxu0 0.0
        %2118 = vmatpush.msra.mxu0 0.0
        %2119 = vmatpush.msra.mxu0 0.0
        %2120 = vmatpush.msra.mxu0 %v2082
        %2121 = vmatpush.msra.mxu0 %v2080
        %2122 = vmatmul.f32.gmra.mxu0 %v2101
        %v2123 = vpop.f32.mrf.mxu0
        %v2124 = vadd.f32 %v2093, %v2123
        %2125 = vmatmul.f32.gmra.mxu0 %v2104
        %v2126 = vpop.f32.mrf.mxu0
        %v2127 = vadd.f32 %v2098, %v2126
        %2128 = vdwg.mxu0
        %2129 = vmatpush.msra.mxu0 0.0
        %2130 = vmatpush.msra.mxu0 0.0
        %2131 = vmatpush.msra.mxu0 0.0
        %2132 = vmatpush.msra.mxu0 0.0
        %2133 = vmatpush.msra.mxu0 0.0
        %2134 = vmatpush.msra.mxu0 0.0
        %2135 = vmatpush.msra.mxu0 0.0
        %2136 = vmatpush.msra.mxu0 0.0
        %2137 = vmatpush.msra.mxu0 0.0
        %2138 = vmatpush.msra.mxu0 0.0
        %2139 = vmatpush.msra.mxu0 0.0
        %2140 = vmatpush.msra.mxu0 0.0
        %2141 = vmatpush.msra.mxu0 0.0
        %2142 = vmatpush.msra.mxu0 0.0
        %2143 = vmatpush.msra.mxu0 %v2083
        %2144 = vmatpush.msra.mxu0 %v2081
        %2145 = vmatmul.f32.gmra.mxu0 %v2101
        %v2146 = vpop.f32.mrf.mxu0
        %v2147 = vadd.f32 %v2093, %v2146
        %2148 = vmatmul.f32.gmra.mxu0 %v2104
        %v2149 = vpop.f32.mrf.mxu0
        %v2150 = vadd.f32 %v2098, %v2149
        %2151 = vdwg.mxu0
        %v2152 = vmax.f32 %v2124, 0.0
        %v2153 = vmax.f32 %v2147, 0.0
        %v2154 = vmax.f32 %v2127, 0.0
        %v2155 = vmax.f32 %v2150, 0.0
        %v2156 = vld [vmem:[%s11] sm:$0xf]
        %v2157 = vld [vmem:[%s11 + $0x4] sm:$0xf]
        %v2158 = vunpack.c.l.bf16 %v2156
        %v2159 = vunpack.c.l.bf16 %v2157
        %2161 = vset.pattern.permute.xlu0 0
        %2162 = vperm.xlu0 %2161, %v2158
        %v2163 = vpop.permute.xlu0 %2162
        %2166 = vset.pattern.permute.xlu0 0
        %2167 = vperm.xlu0 %2166, %v2159
        %v2168 = vpop.permute.xlu0 %2167
        %v2170 = vmul.f32 %v2152, %v2163
        %v2171 = vmul.f32 %v2153, %v2163
        %v2172 = vmul.f32 %v2154, %v2168
        %v2173 = vmul.f32 %v2155, %v2168
        %v2174 = vadd.f32 %v2170, %v2172
        %v2175 = vrot.slane %v2174, 4
        %v2176 = vadd.f32 %v2174, %v2175
        %v2177 = vrot.slane %v2176, 2
        %v2178 = vadd.f32 %v2176, %v2177
        %v2179 = vrot.slane %v2178, 1
        %v2180 = vadd.f32 %v2178, %v2179
        %v2181 = vadd.f32 %v2171, %v2173
        %v2182 = vrot.slane %v2181, 4
        %v2183 = vadd.f32 %v2181, %v2182
        %v2184 = vrot.slane %v2183, 2
        %v2185 = vadd.f32 %v2183, %v2184
        %v2186 = vrot.slane %v2185, 1
        %v2187 = vadd.f32 %v2185, %v2186
        %v2188 = vld [vmem:[#allocation2] sm:$0x1]
        %2190 = vset.pattern.permute.xlu0 0
        %2191 = vperm.xlu0 %2190, %v2188
        %v2192 = vpop.permute.xlu0 %2191
        %v2194 = vperm.slane %v2192, 0
        %v2195 = vadd.f32 %v2180, %v2194
        %v2196 = vadd.f32 %v2187, %v2194
        %vm2197 = vcmp.lt.s32.totalorder %v468, 64
        %vm2198 = vcmp.lt.s32.totalorder %v469, 64
        %v2199 = vsel %vm2197, %v2195, 0.0
        %v2200 = vsel %vm2198, %v2196, 0.0
        %v2203 = vrot.slane %v2200, 7
        %vm2204 = vcmask 1040384
        %v2205 = vsel %vm2204, %v2199, %v2203
        %v2207 = vlaneseq
        %vm2208 = vcmp.ge.s32.totalorder %v2207, 0
        %vm2209 = vcmp.lt.s32.totalorder %v2207, 256
        %vm2210 = vmand %vm2208, %vm2209
        %2211 = vst.msk [vmem:[%s435] sm:$0x3] %vm2210, %v2205
        %s2212 = sand.u32 %s315, 1
        %s2213 = scalar_lea.sflag [#allocation4], %s2212
        %s2214 = sand.u32 %s315, 1
        %s2215 = smul.addr %s2214, 2
        %s2216 = scalar_lea.vmem [#allocation3], %s2215
        // Predicated region
        $region73: #{tpu_custom_call.1} parent=71 // pred_check
          %p2217 = pneg %p325
        $region74: #{tpu_custom_call.1} parent=71 // pred_check_branch
          %2219 = sbr.rel (%p2217) target = $region76
        $region75: #{tpu_custom_call.1} parent=71 // pred_region
          %2221 = vsyncadd %s2213, 0
          %s2222 = smul.addr %s29, 2
          %s2223 = scalar_lea.hbm %s13, %s2222
          %s2225 = sshll.u32 %s2216, 4
          %s2226 = int_to_ptr.vmem [resolvable:$true] %s2225
          %s2227 = sshll.u32 %s2223, 4
          %s2228 = int_to_ptr.hbm [resolvable:$true] %s2227
          %2230 = dma.vmem_to_hbm [thread:$0]  %s2226, 32, %s2228, %s2213
        $region76: #{tpu_custom_call.1} parent=71 // pred_fallthru
          _
      $region72: #{tpu_custom_call.1} parent=5 // pred_fallthru
        _
      %p2231 = scmp.le.s32.totalorder 2, %s24
      // Predicated region
      $region77: #{tpu_custom_call.1} parent=5 // pred_check
        %p2232 = pneg %p2231
      $region78: #{tpu_custom_call.1} parent=5 // pred_check_branch
        %2234 = sbr.rel (%p2232) target = $region80
      $region79: #{tpu_custom_call.1} parent=5 // pred_region
        %s2235 = ssub.s32 %s24, 2
        // Predicated region
        $region81: #{tpu_custom_call.1} parent=79 // pred_check
          %p2236 = pneg %p331
        $region82: #{tpu_custom_call.1} parent=79 // pred_check_branch
          %2238 = sbr.rel (%p2236) target = $region84
        $region83: #{tpu_custom_call.1} parent=79 // pred_region
          %s2239 = sand.u32 %s316, 1
          %s2240 = scalar_lea.sflag [#allocation4], %s2239
          %s2241 = sand.u32 %s316, 1
          %s2242 = smul.addr %s2241, 2
          %s2243 = scalar_lea.vmem [#allocation3], %s2242
          %2245 = dma.done %s2240, 32
        $region84: #{tpu_custom_call.1} parent=79 // pred_fallthru
          _
      $region80: #{tpu_custom_call.1} parent=5 // pred_fallthru
        _
    $region6: #{tpu_custom_call.1} parent=1 // loop_footer
      %s28 = sadd.s32 1, %s24
    $region7: #{tpu_custom_call.1} parent=1 // loop_footer_branch
      %23 = sbr.rel target = $region3
    $region8: #{tpu_custom_call.1} parent=1 // loop_exit
      _
    %2246 = vsyncpa [#allocation4], 1
    %s2247 = scalar_lea.sflag [#allocation4], 1
    %2248 = vsyncpa %s2247, 1

</llo_original>
